<compile_context>
chip_gen: v7x
topology: tpu7x:2x2x1
jax: 0.10.0
libtpu: 0.0.40
codegen_flags: <defaults>
</compile_context>

<pallas_src>
import jax
import jax.numpy as jnp
from jax.experimental import pallas as pl
from jax.experimental.pallas import tpu as pltpu

# ----- config (mirrors pyimagesearch `config`) -----
ENCODER_CHANNELS = (3, 8, 16)
CONV_KERNEL_SIZE = 3
POOL_KERNEL_SIZE = 2


# ----------------- static shape bookkeeping -----------------
def _block_dims(H, W, Cin, Cout, k, pool):
    H1, W1 = H - k + 1, W - k + 1          # after conv1 (VALID)
    H2, W2 = H1 - k + 1, W1 - k + 1        # after conv2 (VALID)
    Hp, Wp = H2 // pool, W2 // pool        # after 2x2/2 maxpool (floor)
    return dict(H=H, W=W, Cin=Cin, C=Cout,
                H1=H1, W1=W1, H2=H2, W2=W2, Hp=Hp, Wp=Wp)


# ----------------- fused whole-encoder kernel -----------------
def _make_encoder_kernel(k, dims, pool):
    """One grid step == one batch sample through ALL encoder blocks.

    Ref layout (inputs, outputs, scratch):
      x_ref                          (H, W*Cin)       lane-merged input sample
      per block b: t1,b1,t2,b2       Toeplitz row matrices + tiled biases
      per non-last block b: 2*pool   0/1 pool selection matrices (rows then cols)
      per block b: skip_ref          (H2, W2*C)       pre-pool activation (block output)
      per block b: y1 scratch        (H1, W1*C)       conv1 output staging (VMEM)
      per non-last block b: pooled   (Hp, Wp*C)       pooled activation staging (VMEM)
    """
    nb = len(dims)
    n_w = 4 * nb
    n_p = 2 * pool * (nb - 1)

    def kernel(*refs):
        x_ref = refs[0]
        w_refs = refs[1:1 + n_w]
        p_refs = refs[1 + n_w:1 + n_w + n_p]
        skip_refs = refs[1 + n_w + n_p:1 + n_w + n_p + nb]
        scr = refs[1 + n_w + n_p + nb:]
        y1_scr = scr[:nb]
        pool_scr = scr[nb:]

        cur = x_ref  # ref holding the current block's lane-merged input
        for b, d in enumerate(dims):
            t1, b1, t2, b2 = w_refs[4 * b:4 * b + 4]
            H1, H2 = d["H1"], d["H2"]
            C = d["C"]

            # ---- conv1 + ReLU: k row-tap MXU matmuls, taps loaded straight from `cur`
            acc = jnp.dot(cur[0:H1, :], t1[0], preferred_element_type=jnp.float32)
            for kh in range(1, k):
                acc = acc + jnp.dot(cur[kh:kh + H1, :], t1[kh],
                                    preferred_element_type=jnp.float32)
            y1_scr[b][...] = jnp.maximum(acc + b1[...], 0.0)

            # ---- conv2 + ReLU: taps loaded from the staged VMEM scratch
            acc = jnp.dot(y1_scr[b][0:H2, :], t2[0], preferred_element_type=jnp.float32)
            for kh in range(1, k):
                acc = acc + jnp.dot(y1_scr[b][kh:kh + H2, :], t2[kh],
                                    preferred_element_type=jnp.float32)
            y2 = jnp.maximum(acc + b2[...], 0.0)
            skip_refs[b][...] = y2.astype(skip_refs[b].dtype)

            # ---- 2x2/2 maxpool (skipped entirely on the last block: result unused)
            if b + 1 < nb:
                ps = p_refs[2 * pool * b:2 * pool * (b + 1)]
                row_sel, col_sel = ps[:pool], ps[pool:]
                # max over row pairs: max_p (R_p @ y2), R_p are 0/1 selectors -> (Hp, W2*C)
                rmax = jnp.dot(row_sel[0][...], y2, preferred_element_type=jnp.float32)
                for p in range(1, pool):
                    rmax = jnp.maximum(
                        rmax, jnp.dot(row_sel[p][...], y2,
                                      preferred_element_type=jnp.float32))
                # max over lane (width) pairs: max_p (rmax @ C_p) -> (Hp, Wp*C)
                pooled = jnp.dot(rmax, col_sel[0][...],
                                 preferred_element_type=jnp.float32)
                for p in range(1, pool):
                    pooled = jnp.maximum(
                        pooled, jnp.dot(rmax, col_sel[p][...],
                                        preferred_element_type=jnp.float32))
                pool_scr[b][...] = pooled      # single bulk store; feeds next block
                cur = pool_scr[b]

    return kernel


# ----------------- host-side weight preprocessing -----------------
def _conv_row_matrices(w, W_in, W_out):
    """w: (k, k, Cin, Cout) HWIO -> (k, W_in*Cin, W_out*Cout) block-Toeplitz matrices.

    T[kh, w_in*Cin+cin, w_out*Cout+co] = w[kh, w_in-w_out, cin, co] if 0 <= w_in-w_out < k.
    """
    k = w.shape[0]
    diff = jnp.arange(W_in)[:, None] - jnp.arange(W_out)[None, :]       # (W_in, W_out)
    valid = ((diff >= 0) & (diff < k)).astype(w.dtype)
    kw = jnp.clip(diff, 0, k - 1)
    t = w[:, kw, :, :] * valid[None, :, :, None, None]                  # (k, W_in, W_out, Cin, Cout)
    t = jnp.transpose(t, (0, 1, 3, 2, 4))                               # (k, W_in, Cin, W_out, Cout)
    return t.reshape(k, W_in * w.shape[2], W_out * w.shape[3])


def _pool_select_matrices(H2, W2, C, pool):
    """0/1 selection matrices so the maxpool becomes MXU matmuls + elementwise max."""
    Hp, Wp = H2 // pool, W2 // pool
    row_sel, col_sel = [], []
    for p in range(pool):
        r = jnp.zeros((Hp, H2), jnp.float32)
        r = r.at[jnp.arange(Hp), pool * jnp.arange(Hp) + p].set(1.0)
        row_sel.append(r)
        rows = jnp.arange(W2 * C)
        cols = jnp.arange(Wp * C)
        c = ((rows[:, None] // C == pool * (cols[None, :] // C) + p)
             & (rows[:, None] % C == cols[None, :] % C)).astype(jnp.float32)
        col_sel.append(c)
    return row_sel + col_sel        # length 2*pool: row selectors then column selectors


# ----------------- builder / wrapper -----------------
def build_encoder(params, N, H, W, Cin, dtype=jnp.float32,
                  k=CONV_KERNEL_SIZE, pool=POOL_KERNEL_SIZE):
    """Precompute all constant tensors and return a jitted forward:
       x_nchw (N, Cin, H, W) -> list of per-block pre-pool activations, NCHW."""
    dims, w_tensors, pool_tensors = [], [], []
    h, w_, cin = H, W, Cin
    nb = len(params)
    for bi, (w1, b1, w2, b2) in enumerate(params):
        C = w1.shape[-1]
        d = _block_dims(h, w_, cin, C, k, pool)
        dims.append(d)
        t1 = _conv_row_matrices(w1, d["W"], d["W1"]).astype(dtype)   # (k, W*Cin,  W1*C)
        t2 = _conv_row_matrices(w2, d["W1"], d["W2"]).astype(dtype)  # (k, W1*C,   W2*C)
        b1t = jnp.tile(b1, d["W1"])[None, :].astype(dtype)           # (1, W1*C)
        b2t = jnp.tile(b2, d["W2"])[None, :].astype(dtype)           # (1, W2*C)
        w_tensors += [t1, b1t, t2, b2t]
        if bi + 1 < nb:
            pool_tensors += _pool_select_matrices(d["H2"], d["W2"], C, pool)
            h, w_, cin = d["Hp"], d["Wp"], C

    const_inputs = w_tensors + pool_tensors

    def _const_spec(a):
        return pl.BlockSpec(a.shape, lambda n, nd=a.ndim: (0,) * nd)

    in_specs = ([pl.BlockSpec((None, H, W * Cin), lambda n: (n, 0, 0))]
                + [_const_spec(a) for a in const_inputs])
    out_specs = tuple(
        pl.BlockSpec((None, d["H2"], d["W2"] * d["C"]), lambda n: (n, 0, 0))
        for d in dims)
    out_shape = tuple(
        jax.ShapeDtypeStruct((N, d["H2"], d["W2"] * d["C"]), dtype) for d in dims)
    scratch_shapes = (
        [pltpu.VMEM((d["H1"], d["W1"] * d["C"]), jnp.float32) for d in dims]
        + [pltpu.VMEM((d["Hp"], d["Wp"] * d["C"]), jnp.float32) for d in dims[:-1]])

    call = pl.pallas_call(
        _make_encoder_kernel(k, dims, pool),
        out_shape=out_shape,
        grid=(N,),
        in_specs=in_specs,
        out_specs=out_specs,
        scratch_shapes=scratch_shapes,
        compiler_params=pltpu.CompilerParams(
            dimension_semantics=("parallel",)),     # 2-wide batch axis -> both TCs on v7x
    )

    def forward(x_nchw):
        # NCHW -> lane-merged (N, H, W*Cin): the only XLA-side layout op on the input.
        x2d = jnp.transpose(x_nchw, (0, 2, 3, 1)).reshape(N, H, W * Cin)
        skips = call(x2d, *const_inputs)
        outs = []
        for d, s in zip(dims, skips):
            outs.append(jnp.transpose(
                s.reshape(N, d["H2"], d["W2"], d["C"]), (0, 3, 1, 2)))
        return outs

    return jax.jit(forward)


def init_params(key, channels=ENCODER_CHANNELS, k=CONV_KERNEL_SIZE):
    params = []
    for cin, cout in zip(channels[:-1], channels[1:]):
        key, k1, k2, k3, k4 = jax.random.split(key, 5)
        s1 = 1.0 / float(k * k * cin) ** 0.5
        s2 = 1.0 / float(k * k * cout) ** 0.5
        w1 = jax.random.normal(k1, (k, k, cin, cout), jnp.float32) * s1
        b1 = jax.random.normal(k2, (cout,), jnp.float32) * s1
        w2 = jax.random.normal(k3, (k, k, cout, cout), jnp.float32) * s2
        b2 = jax.random.normal(k4, (cout,), jnp.float32) * s2
        params.append((w1, b1, w2, b2))
    return params


# ----------------- pure-JAX reference -----------------
def _conv_ref(x, w_hwio, b):
    w = jnp.transpose(w_hwio, (3, 2, 0, 1))      # HWIO -> OIHW
    y = jax.lax.conv_general_dilated(
        x, w, window_strides=(1, 1), padding="VALID",
        dimension_numbers=("NCHW", "OIHW", "NCHW"))
    return y + b[None, :, None, None]


def _pool_ref(x):
    return jax.lax.reduce_window(x, -jnp.inf, jax.lax.max,
                                 (1, 1, 2, 2), (1, 1, 2, 2), "VALID")


def encoder_ref(x_nchw, params):
    outs, x = [], x_nchw
    for (w1, b1, w2, b2) in params:
        x = jax.nn.relu(_conv_ref(x, w1, b1))
        x = jax.nn.relu(_conv_ref(x, w2, b2))
        outs.append(x)
        x = _pool_ref(x)
    return outs


# ----------------- main -----------------
if __name__ == "__main__":
    key = jax.random.PRNGKey(0)
    kx, kp = jax.random.split(key)
    N, H, W = 2, 16, 16
    x = jax.random.normal(kx, (N, ENCODER_CHANNELS[0], H, W), jnp.float32)
    params = init_params(kp)

    fwd = build_encoder(params, N, H, W, ENCODER_CHANNELS[0])
    outs = fwd(x)
    outs = [jax.block_until_ready(o) for o in outs]

    refs = encoder_ref(x, params)
    assert len(outs) == len(refs)
    for o, r in zip(outs, refs):
        assert o.shape == r.shape, (o.shape, r.shape)
        err = float(jnp.max(jnp.abs(o - r)))
        assert err < 1e-4, err      # all-f32 path: tight tolerance

    print("KERNEL_OK")
</pallas_src>

<mosaic_0001>
module attributes {stable_mosaic.version = 11 : i64} {
  func.func @kernel(%arg0: i32, %arg1: memref<1x16x48xf32, #tpu.memory_space<vmem>>, %arg2: memref<3x48x112xf32, #tpu.memory_space<vmem>>, %arg3: memref<1x112xf32, #tpu.memory_space<vmem>>, %arg4: memref<3x112x96xf32, #tpu.memory_space<vmem>>, %arg5: memref<1x96xf32, #tpu.memory_space<vmem>>, %arg6: memref<3x48x64xf32, #tpu.memory_space<vmem>>, %arg7: memref<1x64xf32, #tpu.memory_space<vmem>>, %arg8: memref<3x64x32xf32, #tpu.memory_space<vmem>>, %arg9: memref<1x32xf32, #tpu.memory_space<vmem>>, %arg10: memref<6x12xf32, #tpu.memory_space<vmem>>, %arg11: memref<6x12xf32, #tpu.memory_space<vmem>>, %arg12: memref<96x48xf32, #tpu.memory_space<vmem>>, %arg13: memref<96x48xf32, #tpu.memory_space<vmem>>, %arg14: memref<1x12x96xf32, #tpu.memory_space<vmem>>, %arg15: memref<1x2x32xf32, #tpu.memory_space<vmem>>, %arg16: memref<14x112xf32, #tpu.memory_space<vmem>>, %arg17: memref<4x64xf32, #tpu.memory_space<vmem>>, %arg18: memref<6x48xf32, #tpu.memory_space<vmem>>) attributes {dimension_semantics = [#tpu.dimension_semantics<parallel>], iteration_bounds = array<i64: 2>, scalar_prefetch = 0 : i64, scratch_operands = 3 : i64, tpu.core_type = #tpu.core_type<tc>, window_params = [{transform_indices = @transform_0, window_bounds = array<i64: 1, 16, 48>}, {pipeline_mode = #tpu.pipeline_mode<synchronous>, transform_indices = @transform_1, window_bounds = array<i64: 3, 48, 112>}, {pipeline_mode = #tpu.pipeline_mode<synchronous>, transform_indices = @transform_2, window_bounds = array<i64: 1, 112>}, {pipeline_mode = #tpu.pipeline_mode<synchronous>, transform_indices = @transform_3, window_bounds = array<i64: 3, 112, 96>}, {pipeline_mode = #tpu.pipeline_mode<synchronous>, transform_indices = @transform_4, window_bounds = array<i64: 1, 96>}, {pipeline_mode = #tpu.pipeline_mode<synchronous>, transform_indices = @transform_5, window_bounds = array<i64: 3, 48, 64>}, {pipeline_mode = #tpu.pipeline_mode<synchronous>, transform_indices = @transform_6, window_bounds = array<i64: 1, 64>}, {pipeline_mode = #tpu.pipeline_mode<synchronous>, transform_indices = @transform_7, window_bounds = array<i64: 3, 64, 32>}, {pipeline_mode = #tpu.pipeline_mode<synchronous>, transform_indices = @transform_8, window_bounds = array<i64: 1, 32>}, {pipeline_mode = #tpu.pipeline_mode<synchronous>, transform_indices = @transform_9, window_bounds = array<i64: 6, 12>}, {pipeline_mode = #tpu.pipeline_mode<synchronous>, transform_indices = @transform_10, window_bounds = array<i64: 6, 12>}, {pipeline_mode = #tpu.pipeline_mode<synchronous>, transform_indices = @transform_11, window_bounds = array<i64: 96, 48>}, {pipeline_mode = #tpu.pipeline_mode<synchronous>, transform_indices = @transform_12, window_bounds = array<i64: 96, 48>}, {transform_indices = @transform_13, window_bounds = array<i64: 1, 12, 96>}, {transform_indices = @transform_14, window_bounds = array<i64: 1, 2, 32>}]} {
    %c0 = arith.constant 0 : index
    %c0_0 = arith.constant 0 : index
    %c0_1 = arith.constant 0 : index
    %0 = vector.load %arg1[%c0, %c0_0, %c0_1] : memref<1x16x48xf32, #tpu.memory_space<vmem>>, vector<1x14x48xf32>
    %1 = vector.shape_cast %0 : vector<1x14x48xf32> to vector<14x48xf32>
    %c0_2 = arith.constant 0 : index
    %c0_3 = arith.constant 0 : index
    %c0_4 = arith.constant 0 : index
    %2 = vector.load %arg2[%c0_2, %c0_3, %c0_4] : memref<3x48x112xf32, #tpu.memory_space<vmem>>, vector<1x48x112xf32>
    %3 = vector.shape_cast %2 : vector<1x48x112xf32> to vector<48x112xf32>
    %cst = arith.constant dense<0.000000e+00> : vector<14x112xf32>
    %4 = tpu.matmul %1, %3, %cst {dimension_numbers = #tpu.dot_dimension_numbers<[1], [0], [0], [1], [0, 0, 1, 1], [], []>} : vector<14x48xf32>, vector<48x112xf32>, vector<14x112xf32> -> vector<14x112xf32>
    %c0_5 = arith.constant 0 : index
    %c1 = arith.constant 1 : index
    %c0_6 = arith.constant 0 : index
    %5 = vector.load %arg1[%c0_5, %c1, %c0_6] : memref<1x16x48xf32, #tpu.memory_space<vmem>>, vector<1x14x48xf32>
    %6 = vector.shape_cast %5 : vector<1x14x48xf32> to vector<14x48xf32>
    %c1_7 = arith.constant 1 : index
    %c0_8 = arith.constant 0 : index
    %c0_9 = arith.constant 0 : index
    %7 = vector.load %arg2[%c1_7, %c0_8, %c0_9] : memref<3x48x112xf32, #tpu.memory_space<vmem>>, vector<1x48x112xf32>
    %8 = vector.shape_cast %7 : vector<1x48x112xf32> to vector<48x112xf32>
    %cst_10 = arith.constant dense<0.000000e+00> : vector<14x112xf32>
    %9 = tpu.matmul %6, %8, %cst_10 {dimension_numbers = #tpu.dot_dimension_numbers<[1], [0], [0], [1], [0, 0, 1, 1], [], []>} : vector<14x48xf32>, vector<48x112xf32>, vector<14x112xf32> -> vector<14x112xf32>
    %10 = arith.addf %4, %9 : vector<14x112xf32>
    %c0_11 = arith.constant 0 : index
    %c2 = arith.constant 2 : index
    %c0_12 = arith.constant 0 : index
    %11 = vector.load %arg1[%c0_11, %c2, %c0_12] : memref<1x16x48xf32, #tpu.memory_space<vmem>>, vector<1x14x48xf32>
    %12 = vector.shape_cast %11 : vector<1x14x48xf32> to vector<14x48xf32>
    %c2_13 = arith.constant 2 : index
    %c0_14 = arith.constant 0 : index
    %c0_15 = arith.constant 0 : index
    %13 = vector.load %arg2[%c2_13, %c0_14, %c0_15] : memref<3x48x112xf32, #tpu.memory_space<vmem>>, vector<1x48x112xf32>
    %14 = vector.shape_cast %13 : vector<1x48x112xf32> to vector<48x112xf32>
    %cst_16 = arith.constant dense<0.000000e+00> : vector<14x112xf32>
    %15 = tpu.matmul %12, %14, %cst_16 {dimension_numbers = #tpu.dot_dimension_numbers<[1], [0], [0], [1], [0, 0, 1, 1], [], []>} : vector<14x48xf32>, vector<48x112xf32>, vector<14x112xf32> -> vector<14x112xf32>
    %16 = arith.addf %10, %15 : vector<14x112xf32>
    %c0_17 = arith.constant 0 : index
    %c0_18 = arith.constant 0 : index
    %17 = vector.load %arg3[%c0_17, %c0_18] : memref<1x112xf32, #tpu.memory_space<vmem>>, vector<1x112xf32>
    %18 = vector.broadcast %17 : vector<1x112xf32> to vector<14x112xf32>
    %19 = arith.addf %16, %18 : vector<14x112xf32>
    %cst_19 = arith.constant 0.000000e+00 : f32
    %20 = vector.broadcast %cst_19 : f32 to vector<14x112xf32>
    %21 = arith.maximumf %19, %20 : vector<14x112xf32>
    %c0_20 = arith.constant 0 : index
    %c0_21 = arith.constant 0 : index
    %22 = vector.load %arg16[%c0_20, %c0_21] : memref<14x112xf32, #tpu.memory_space<vmem>>, vector<14x112xf32>
    tpu.vector_store %arg16[%c0_20, %c0_21], %21 {strides = array<i32>} : memref<14x112xf32, #tpu.memory_space<vmem>>, vector<14x112xf32>,
    %c0_22 = arith.constant 0 : index
    %c0_23 = arith.constant 0 : index
    %23 = vector.load %arg16[%c0_22, %c0_23] : memref<14x112xf32, #tpu.memory_space<vmem>>, vector<12x112xf32>
    %c0_24 = arith.constant 0 : index
    %c0_25 = arith.constant 0 : index
    %c0_26 = arith.constant 0 : index
    %24 = vector.load %arg4[%c0_24, %c0_25, %c0_26] : memref<3x112x96xf32, #tpu.memory_space<vmem>>, vector<1x112x96xf32>
    %25 = vector.shape_cast %24 : vector<1x112x96xf32> to vector<112x96xf32>
    %cst_27 = arith.constant dense<0.000000e+00> : vector<12x96xf32>
    %26 = tpu.matmul %23, %25, %cst_27 {dimension_numbers = #tpu.dot_dimension_numbers<[1], [0], [0], [1], [0, 0, 1, 1], [], []>} : vector<12x112xf32>, vector<112x96xf32>, vector<12x96xf32> -> vector<12x96xf32>
    %c1_28 = arith.constant 1 : index
    %c0_29 = arith.constant 0 : index
    %27 = vector.load %arg16[%c1_28, %c0_29] : memref<14x112xf32, #tpu.memory_space<vmem>>, vector<12x112xf32>
    %c1_30 = arith.constant 1 : index
    %c0_31 = arith.constant 0 : index
    %c0_32 = arith.constant 0 : index
    %28 = vector.load %arg4[%c1_30, %c0_31, %c0_32] : memref<3x112x96xf32, #tpu.memory_space<vmem>>, vector<1x112x96xf32>
    %29 = vector.shape_cast %28 : vector<1x112x96xf32> to vector<112x96xf32>
    %cst_33 = arith.constant dense<0.000000e+00> : vector<12x96xf32>
    %30 = tpu.matmul %27, %29, %cst_33 {dimension_numbers = #tpu.dot_dimension_numbers<[1], [0], [0], [1], [0, 0, 1, 1], [], []>} : vector<12x112xf32>, vector<112x96xf32>, vector<12x96xf32> -> vector<12x96xf32>
    %31 = arith.addf %26, %30 : vector<12x96xf32>
    %c2_34 = arith.constant 2 : index
    %c0_35 = arith.constant 0 : index
    %32 = vector.load %arg16[%c2_34, %c0_35] : memref<14x112xf32, #tpu.memory_space<vmem>>, vector<12x112xf32>
    %c2_36 = arith.constant 2 : index
    %c0_37 = arith.constant 0 : index
    %c0_38 = arith.constant 0 : index
    %33 = vector.load %arg4[%c2_36, %c0_37, %c0_38] : memref<3x112x96xf32, #tpu.memory_space<vmem>>, vector<1x112x96xf32>
    %34 = vector.shape_cast %33 : vector<1x112x96xf32> to vector<112x96xf32>
    %cst_39 = arith.constant dense<0.000000e+00> : vector<12x96xf32>
    %35 = tpu.matmul %32, %34, %cst_39 {dimension_numbers = #tpu.dot_dimension_numbers<[1], [0], [0], [1], [0, 0, 1, 1], [], []>} : vector<12x112xf32>, vector<112x96xf32>, vector<12x96xf32> -> vector<12x96xf32>
    %36 = arith.addf %31, %35 : vector<12x96xf32>
    %c0_40 = arith.constant 0 : index
    %c0_41 = arith.constant 0 : index
    %37 = vector.load %arg5[%c0_40, %c0_41] : memref<1x96xf32, #tpu.memory_space<vmem>>, vector<1x96xf32>
    %38 = vector.broadcast %37 : vector<1x96xf32> to vector<12x96xf32>
    %39 = arith.addf %36, %38 : vector<12x96xf32>
    %cst_42 = arith.constant 0.000000e+00 : f32
    %40 = vector.broadcast %cst_42 : f32 to vector<12x96xf32>
    %41 = arith.maximumf %39, %40 : vector<12x96xf32>
    %c0_43 = arith.constant 0 : index
    %c0_44 = arith.constant 0 : index
    %c0_45 = arith.constant 0 : index
    %42 = vector.load %arg14[%c0_43, %c0_44, %c0_45] : memref<1x12x96xf32, #tpu.memory_space<vmem>>, vector<1x12x96xf32>
    %43 = vector.shape_cast %42 : vector<1x12x96xf32> to vector<12x96xf32>
    %44 = vector.shape_cast %41 : vector<12x96xf32> to vector<1x12x96xf32>
    tpu.vector_store %arg14[%c0_43, %c0_44, %c0_45], %44 {strides = array<i32>} : memref<1x12x96xf32, #tpu.memory_space<vmem>>, vector<1x12x96xf32>,
    %c0_46 = arith.constant 0 : index
    %c0_47 = arith.constant 0 : index
    %45 = vector.load %arg10[%c0_46, %c0_47] : memref<6x12xf32, #tpu.memory_space<vmem>>, vector<6x12xf32>
    %cst_48 = arith.constant dense<0.000000e+00> : vector<6x96xf32>
    %46 = tpu.matmul %45, %41, %cst_48 {dimension_numbers = #tpu.dot_dimension_numbers<[1], [0], [0], [1], [0, 0, 1, 1], [], []>} : vector<6x12xf32>, vector<12x96xf32>, vector<6x96xf32> -> vector<6x96xf32>
    %c0_49 = arith.constant 0 : index
    %c0_50 = arith.constant 0 : index
    %47 = vector.load %arg11[%c0_49, %c0_50] : memref<6x12xf32, #tpu.memory_space<vmem>>, vector<6x12xf32>
    %cst_51 = arith.constant dense<0.000000e+00> : vector<6x96xf32>
    %48 = tpu.matmul %47, %41, %cst_51 {dimension_numbers = #tpu.dot_dimension_numbers<[1], [0], [0], [1], [0, 0, 1, 1], [], []>} : vector<6x12xf32>, vector<12x96xf32>, vector<6x96xf32> -> vector<6x96xf32>
    %49 = arith.maximumf %46, %48 : vector<6x96xf32>
    %c0_52 = arith.constant 0 : index
    %c0_53 = arith.constant 0 : index
    %50 = vector.load %arg12[%c0_52, %c0_53] : memref<96x48xf32, #tpu.memory_space<vmem>>, vector<96x48xf32>
    %cst_54 = arith.constant dense<0.000000e+00> : vector<6x48xf32>
    %51 = tpu.matmul %49, %50, %cst_54 {dimension_numbers = #tpu.dot_dimension_numbers<[1], [0], [0], [1], [0, 0, 1, 1], [], []>} : vector<6x96xf32>, vector<96x48xf32>, vector<6x48xf32> -> vector<6x48xf32>
    %c0_55 = arith.constant 0 : index
    %c0_56 = arith.constant 0 : index
    %52 = vector.load %arg13[%c0_55, %c0_56] : memref<96x48xf32, #tpu.memory_space<vmem>>, vector<96x48xf32>
    %cst_57 = arith.constant dense<0.000000e+00> : vector<6x48xf32>
    %53 = tpu.matmul %49, %52, %cst_57 {dimension_numbers = #tpu.dot_dimension_numbers<[1], [0], [0], [1], [0, 0, 1, 1], [], []>} : vector<6x96xf32>, vector<96x48xf32>, vector<6x48xf32> -> vector<6x48xf32>
    %54 = arith.maximumf %51, %53 : vector<6x48xf32>
    %c0_58 = arith.constant 0 : index
    %c0_59 = arith.constant 0 : index
    %55 = vector.load %arg18[%c0_58, %c0_59] : memref<6x48xf32, #tpu.memory_space<vmem>>, vector<6x48xf32>
    tpu.vector_store %arg18[%c0_58, %c0_59], %54 {strides = array<i32>} : memref<6x48xf32, #tpu.memory_space<vmem>>, vector<6x48xf32>,
    %c0_60 = arith.constant 0 : index
    %c0_61 = arith.constant 0 : index
    %56 = vector.load %arg18[%c0_60, %c0_61] : memref<6x48xf32, #tpu.memory_space<vmem>>, vector<4x48xf32>
    %c0_62 = arith.constant 0 : index
    %c0_63 = arith.constant 0 : index
    %c0_64 = arith.constant 0 : index
    %57 = vector.load %arg6[%c0_62, %c0_63, %c0_64] : memref<3x48x64xf32, #tpu.memory_space<vmem>>, vector<1x48x64xf32>
    %58 = vector.shape_cast %57 : vector<1x48x64xf32> to vector<48x64xf32>
    %cst_65 = arith.constant dense<0.000000e+00> : vector<4x64xf32>
    %59 = tpu.matmul %56, %58, %cst_65 {dimension_numbers = #tpu.dot_dimension_numbers<[1], [0], [0], [1], [0, 0, 1, 1], [], []>} : vector<4x48xf32>, vector<48x64xf32>, vector<4x64xf32> -> vector<4x64xf32>
    %c1_66 = arith.constant 1 : index
    %c0_67 = arith.constant 0 : index
    %60 = vector.load %arg18[%c1_66, %c0_67] : memref<6x48xf32, #tpu.memory_space<vmem>>, vector<4x48xf32>
    %c1_68 = arith.constant 1 : index
    %c0_69 = arith.constant 0 : index
    %c0_70 = arith.constant 0 : index
    %61 = vector.load %arg6[%c1_68, %c0_69, %c0_70] : memref<3x48x64xf32, #tpu.memory_space<vmem>>, vector<1x48x64xf32>
    %62 = vector.shape_cast %61 : vector<1x48x64xf32> to vector<48x64xf32>
    %cst_71 = arith.constant dense<0.000000e+00> : vector<4x64xf32>
    %63 = tpu.matmul %60, %62, %cst_71 {dimension_numbers = #tpu.dot_dimension_numbers<[1], [0], [0], [1], [0, 0, 1, 1], [], []>} : vector<4x48xf32>, vector<48x64xf32>, vector<4x64xf32> -> vector<4x64xf32>
    %64 = arith.addf %59, %63 : vector<4x64xf32>
    %c2_72 = arith.constant 2 : index
    %c0_73 = arith.constant 0 : index
    %65 = vector.load %arg18[%c2_72, %c0_73] : memref<6x48xf32, #tpu.memory_space<vmem>>, vector<4x48xf32>
    %c2_74 = arith.constant 2 : index
    %c0_75 = arith.constant 0 : index
    %c0_76 = arith.constant 0 : index
    %66 = vector.load %arg6[%c2_74, %c0_75, %c0_76] : memref<3x48x64xf32, #tpu.memory_space<vmem>>, vector<1x48x64xf32>
    %67 = vector.shape_cast %66 : vector<1x48x64xf32> to vector<48x64xf32>
    %cst_77 = arith.constant dense<0.000000e+00> : vector<4x64xf32>
    %68 = tpu.matmul %65, %67, %cst_77 {dimension_numbers = #tpu.dot_dimension_numbers<[1], [0], [0], [1], [0, 0, 1, 1], [], []>} : vector<4x48xf32>, vector<48x64xf32>, vector<4x64xf32> -> vector<4x64xf32>
    %69 = arith.addf %64, %68 : vector<4x64xf32>
    %c0_78 = arith.constant 0 : index
    %c0_79 = arith.constant 0 : index
    %70 = vector.load %arg7[%c0_78, %c0_79] : memref<1x64xf32, #tpu.memory_space<vmem>>, vector<1x64xf32>
    %71 = vector.broadcast %70 : vector<1x64xf32> to vector<4x64xf32>
    %72 = arith.addf %69, %71 : vector<4x64xf32>
    %cst_80 = arith.constant 0.000000e+00 : f32
    %73 = vector.broadcast %cst_80 : f32 to vector<4x64xf32>
    %74 = arith.maximumf %72, %73 : vector<4x64xf32>
    %c0_81 = arith.constant 0 : index
    %c0_82 = arith.constant 0 : index
    %75 = vector.load %arg17[%c0_81, %c0_82] : memref<4x64xf32, #tpu.memory_space<vmem>>, vector<4x64xf32>
    tpu.vector_store %arg17[%c0_81, %c0_82], %74 {strides = array<i32>} : memref<4x64xf32, #tpu.memory_space<vmem>>, vector<4x64xf32>,
    %c0_83 = arith.constant 0 : index
    %c0_84 = arith.constant 0 : index
    %76 = vector.load %arg17[%c0_83, %c0_84] : memref<4x64xf32, #tpu.memory_space<vmem>>, vector<2x64xf32>
    %c0_85 = arith.constant 0 : index
    %c0_86 = arith.constant 0 : index
    %c0_87 = arith.constant 0 : index
    %77 = vector.load %arg8[%c0_85, %c0_86, %c0_87] : memref<3x64x32xf32, #tpu.memory_space<vmem>>, vector<1x64x32xf32>
    %78 = vector.shape_cast %77 : vector<1x64x32xf32> to vector<64x32xf32>
    %cst_88 = arith.constant dense<0.000000e+00> : vector<2x32xf32>
    %79 = tpu.matmul %76, %78, %cst_88 {dimension_numbers = #tpu.dot_dimension_numbers<[1], [0], [0], [1], [0, 0, 1, 1], [], []>} : vector<2x64xf32>, vector<64x32xf32>, vector<2x32xf32> -> vector<2x32xf32>
    %c1_89 = arith.constant 1 : index
    %c0_90 = arith.constant 0 : index
    %80 = vector.load %arg17[%c1_89, %c0_90] : memref<4x64xf32, #tpu.memory_space<vmem>>, vector<2x64xf32>
    %c1_91 = arith.constant 1 : index
    %c0_92 = arith.constant 0 : index
    %c0_93 = arith.constant 0 : index
    %81 = vector.load %arg8[%c1_91, %c0_92, %c0_93] : memref<3x64x32xf32, #tpu.memory_space<vmem>>, vector<1x64x32xf32>
    %82 = vector.shape_cast %81 : vector<1x64x32xf32> to vector<64x32xf32>
    %cst_94 = arith.constant dense<0.000000e+00> : vector<2x32xf32>
    %83 = tpu.matmul %80, %82, %cst_94 {dimension_numbers = #tpu.dot_dimension_numbers<[1], [0], [0], [1], [0, 0, 1, 1], [], []>} : vector<2x64xf32>, vector<64x32xf32>, vector<2x32xf32> -> vector<2x32xf32>
    %84 = arith.addf %79, %83 : vector<2x32xf32>
    %c2_95 = arith.constant 2 : index
    %c0_96 = arith.constant 0 : index
    %85 = vector.load %arg17[%c2_95, %c0_96] : memref<4x64xf32, #tpu.memory_space<vmem>>, vector<2x64xf32>
    %c2_97 = arith.constant 2 : index
    %c0_98 = arith.constant 0 : index
    %c0_99 = arith.constant 0 : index
    %86 = vector.load %arg8[%c2_97, %c0_98, %c0_99] : memref<3x64x32xf32, #tpu.memory_space<vmem>>, vector<1x64x32xf32>
    %87 = vector.shape_cast %86 : vector<1x64x32xf32> to vector<64x32xf32>
    %cst_100 = arith.constant dense<0.000000e+00> : vector<2x32xf32>
    %88 = tpu.matmul %85, %87, %cst_100 {dimension_numbers = #tpu.dot_dimension_numbers<[1], [0], [0], [1], [0, 0, 1, 1], [], []>} : vector<2x64xf32>, vector<64x32xf32>, vector<2x32xf32> -> vector<2x32xf32>
    %89 = arith.addf %84, %88 : vector<2x32xf32>
    %c0_101 = arith.constant 0 : index
    %c0_102 = arith.constant 0 : index
    %90 = vector.load %arg9[%c0_101, %c0_102] : memref<1x32xf32, #tpu.memory_space<vmem>>, vector<1x32xf32>
    %91 = vector.broadcast %90 : vector<1x32xf32> to vector<2x32xf32>
    %92 = arith.addf %89, %91 : vector<2x32xf32>
    %cst_103 = arith.constant 0.000000e+00 : f32
    %93 = vector.broadcast %cst_103 : f32 to vector<2x32xf32>
    %94 = arith.maximumf %92, %93 : vector<2x32xf32>
    %c0_104 = arith.constant 0 : index
    %c0_105 = arith.constant 0 : index
    %c0_106 = arith.constant 0 : index
    %95 = vector.load %arg15[%c0_104, %c0_105, %c0_106] : memref<1x2x32xf32, #tpu.memory_space<vmem>>, vector<1x2x32xf32>
    %96 = vector.shape_cast %95 : vector<1x2x32xf32> to vector<2x32xf32>
    %97 = vector.shape_cast %94 : vector<2x32xf32> to vector<1x2x32xf32>
    tpu.vector_store %arg15[%c0_104, %c0_105, %c0_106], %97 {strides = array<i32>} : memref<1x2x32xf32, #tpu.memory_space<vmem>>, vector<1x2x32xf32>,
    return
  }
  func.func @transform_0(%arg0: i32) -> (i32, i32, i32) {
    %c0_i32 = arith.constant 0 : i32
    %c0_i32_0 = arith.constant 0 : i32
    %c0_i32_1 = arith.constant 0 : i32
    return %arg0, %c0_i32, %c0_i32_0 : i32, i32, i32
  }
  func.func @transform_1(%arg0: i32) -> (i32, i32, i32) {
    %c0_i32 = arith.constant 0 : i32
    %c0_i32_0 = arith.constant 0 : i32
    %c0_i32_1 = arith.constant 0 : i32
    %c0_i32_2 = arith.constant 0 : i32
    return %c0_i32, %c0_i32_0, %c0_i32_1 : i32, i32, i32
  }
  func.func @transform_2(%arg0: i32) -> (i32, i32) {
    %c0_i32 = arith.constant 0 : i32
    %c0_i32_0 = arith.constant 0 : i32
    %c0_i32_1 = arith.constant 0 : i32
    return %c0_i32, %c0_i32_0 : i32, i32
  }
  func.func @transform_3(%arg0: i32) -> (i32, i32, i32) {
    %c0_i32 = arith.constant 0 : i32
    %c0_i32_0 = arith.constant 0 : i32
    %c0_i32_1 = arith.constant 0 : i32
    %c0_i32_2 = arith.constant 0 : i32
    return %c0_i32, %c0_i32_0, %c0_i32_1 : i32, i32, i32
  }
  func.func @transform_4(%arg0: i32) -> (i32, i32) {
    %c0_i32 = arith.constant 0 : i32
    %c0_i32_0 = arith.constant 0 : i32
    %c0_i32_1 = arith.constant 0 : i32
    return %c0_i32, %c0_i32_0 : i32, i32
  }
  func.func @transform_5(%arg0: i32) -> (i32, i32, i32) {
    %c0_i32 = arith.constant 0 : i32
    %c0_i32_0 = arith.constant 0 : i32
    %c0_i32_1 = arith.constant 0 : i32
    %c0_i32_2 = arith.constant 0 : i32
    return %c0_i32, %c0_i32_0, %c0_i32_1 : i32, i32, i32
  }
  func.func @transform_6(%arg0: i32) -> (i32, i32) {
    %c0_i32 = arith.constant 0 : i32
    %c0_i32_0 = arith.constant 0 : i32
    %c0_i32_1 = arith.constant 0 : i32
    return %c0_i32, %c0_i32_0 : i32, i32
  }
  func.func @transform_7(%arg0: i32) -> (i32, i32, i32) {
    %c0_i32 = arith.constant 0 : i32
    %c0_i32_0 = arith.constant 0 : i32
    %c0_i32_1 = arith.constant 0 : i32
    %c0_i32_2 = arith.constant 0 : i32
    return %c0_i32, %c0_i32_0, %c0_i32_1 : i32, i32, i32
  }
  func.func @transform_8(%arg0: i32) -> (i32, i32) {
    %c0_i32 = arith.constant 0 : i32
    %c0_i32_0 = arith.constant 0 : i32
    %c0_i32_1 = arith.constant 0 : i32
    return %c0_i32, %c0_i32_0 : i32, i32
  }
  func.func @transform_9(%arg0: i32) -> (i32, i32) {
    %c0_i32 = arith.constant 0 : i32
    %c0_i32_0 = arith.constant 0 : i32
    %c0_i32_1 = arith.constant 0 : i32
    return %c0_i32, %c0_i32_0 : i32, i32
  }
  func.func @transform_10(%arg0: i32) -> (i32, i32) {
    %c0_i32 = arith.constant 0 : i32
    %c0_i32_0 = arith.constant 0 : i32
    %c0_i32_1 = arith.constant 0 : i32
    return %c0_i32, %c0_i32_0 : i32, i32
  }
  func.func @transform_11(%arg0: i32) -> (i32, i32) {
    %c0_i32 = arith.constant 0 : i32
    %c0_i32_0 = arith.constant 0 : i32
    %c0_i32_1 = arith.constant 0 : i32
    return %c0_i32, %c0_i32_0 : i32, i32
  }
  func.func @transform_12(%arg0: i32) -> (i32, i32) {
    %c0_i32 = arith.constant 0 : i32
    %c0_i32_0 = arith.constant 0 : i32
    %c0_i32_1 = arith.constant 0 : i32
    return %c0_i32, %c0_i32_0 : i32, i32
  }
  func.func @transform_13(%arg0: i32) -> (i32, i32, i32) {
    %c0_i32 = arith.constant 0 : i32
    %c0_i32_0 = arith.constant 0 : i32
    %c0_i32_1 = arith.constant 0 : i32
    return %arg0, %c0_i32, %c0_i32_0 : i32, i32, i32
  }
  func.func @transform_14(%arg0: i32) -> (i32, i32, i32) {
    %c0_i32 = arith.constant 0 : i32
    %c0_i32_0 = arith.constant 0 : i32
    %c0_i32_1 = arith.constant 0 : i32
    return %arg0, %c0_i32, %c0_i32_0 : i32, i32, i32
  }
}

</mosaic_0001>

<llo_original>
// kernel: forward.1
$region0: #{forward.1}
  #allocation0 [shape = 'u32[]', space=smem, size = 0x4, offset = 0x4, fixed_abs, tag = 'smem constant byte address 0x4 - core index']
  #allocation1 [shape = 'u32[144,128]{1,0:T(1,128)}', space=vmem, size = 0x12000, scoped, tag = 'internal scratch']
  #allocation2 [shape = 'f32[14,112]{1,0:T(8,128)}', space=vmem, size = 0x2000, scoped, tag = 'scratch operand']
  #allocation3 [shape = 'f32[4,64]{1,0:T(4,128)}', space=vmem, size = 0x800, scoped, tag = 'scratch operand']
  #allocation4 [shape = 'f32[6,48]{1,0:T(8,128)}', space=vmem, size = 0x1000, scoped, tag = 'scratch operand']
  %s0 = inlined_call_operand.vmem [shape: f32[2,16,48], index: 0, kind: input, shape index: {}]
  %s1 = inlined_call_operand.hbm [shape: f32[3,48,112], index: 1, kind: input, shape index: {}]
  %s2 = inlined_call_operand.vmem [shape: f32[1,112], index: 2, kind: input, shape index: {}]
  %s3 = inlined_call_operand.vmem [shape: f32[3,112,96], index: 3, kind: input, shape index: {}]
  %s4 = inlined_call_operand.vmem [shape: f32[1,96], index: 4, kind: input, shape index: {}]
  %s5 = inlined_call_operand.hbm [shape: f32[3,48,64], index: 5, kind: input, shape index: {}]
  %s6 = inlined_call_operand.vmem [shape: f32[1,64], index: 6, kind: input, shape index: {}]
  %s7 = inlined_call_operand.hbm [shape: f32[3,64,32], index: 7, kind: input, shape index: {}]
  %s8 = inlined_call_operand.vmem [shape: f32[1,32], index: 8, kind: input, shape index: {}]
  %s9 = inlined_call_operand.vmem [shape: f32[6,12], index: 9, kind: input, shape index: {}]
  %s10 = inlined_call_operand.vmem [shape: f32[6,12], index: 10, kind: input, shape index: {}]
  %s11 = inlined_call_operand.hbm [shape: f32[96,48], index: 11, kind: input, shape index: {}]
  %s12 = inlined_call_operand.hbm [shape: f32[96,48], index: 12, kind: input, shape index: {}]
  %s13 = inlined_call_operand.vmem [shape: f32[2,12,96], index: 13, kind: output, shape index: {0}]
  %s14 = inlined_call_operand.vmem [shape: f32[2,2,32], index: 14, kind: output, shape index: {1}]
  %15 = xla_tuple %s13, %s14
  %s16 = sld [smem:[#allocation0]]
  $region113: #{forward.1} parent=0
    _
  %s18 = ssub.s32 1, %s16
  %s19 = scalar_select 0, %s18, %s16
  $region1: #{forward.1} parent=0
    #allocation5 [shape = 'u8[73728]{0}', space=vmem, size = 0x12000, scoped, tag = 'input window, operand 1, single buffered']
    #allocation6 [shape = 's32[2]{0}', space=sflag, size = 0x8, scoped, tag = 'scoped memory for forward.1']
    #allocation7 [shape = 'u8[73728]{0}', space=vmem, size = 0x12000, scoped, tag = 'input window, operand 5, single buffered']
    #allocation8 [shape = 's32[1]{0}', space=sflag, size = 0x4, scoped, tag = 'scoped memory for forward.1']
    #allocation9 [shape = 'u8[98304]{0}', space=vmem, size = 0x18000, scoped, tag = 'input window, operand 7, single buffered']
    #allocation10 [shape = 'u8[49152]{0}', space=vmem, size = 0xc000, scoped, tag = 'input window, operand 11, single buffered']
    #allocation11 [shape = 's32[1]{0}', space=sflag, size = 0x4, scoped, tag = 'scoped memory for forward.1']
    #allocation12 [shape = 'u8[49152]{0}', space=vmem, size = 0xc000, scoped, tag = 'input window, operand 12, single buffered']
    %20 = vsyncpa [#allocation6], 0
    %21 = vsyncpa [#allocation8], 0
    %22 = vsyncpa [#allocation11], 0
    loop: start=0, step=1, limit=4
    $region2: #{forward.1} parent=1 // loop_pre_header
      _
    $region3: #{forward.1} parent=1 // loop_header
      %s24 = sphi 0, %s28
      %p25 = scmp.ge.s32.totalorder %s24, 4
      %s34 = sphi 0, %s36
      %s37 = sphi 0, %s34
      %s38 = sphi 0, %s37
      %s54 = sphi 0, %s38
      %s58 = sphi 0, %s58
      %s60 = sphi 0, %s58
      %s61 = sphi 0, %s60
      %s75 = sphi 0, %s61
      %s79 = sphi 0, %s79
      %s81 = sphi 0, %s79
      %s82 = sphi 0, %s81
      %s96 = sphi 0, %s82
      %s100 = sphi 0, %s100
      %s102 = sphi 0, %s100
      %s103 = sphi 0, %s102
      %s117 = sphi 0, %s103
      %s121 = sphi 0, %s121
      %s123 = sphi 0, %s121
      %s124 = sphi 0, %s123
      %s138 = sphi 0, %s124
      %s142 = sphi 0, %s142
      %s144 = sphi 0, %s142
      %s145 = sphi 0, %s144
      %s159 = sphi 0, %s145
      %s163 = sphi 0, %s163
      %s165 = sphi 0, %s163
      %s166 = sphi 0, %s165
      %s180 = sphi 0, %s166
      %s184 = sphi 0, %s184
      %s186 = sphi 0, %s184
      %s187 = sphi 0, %s186
      %s201 = sphi 0, %s187
      %s205 = sphi 0, %s205
      %s207 = sphi 0, %s205
      %s208 = sphi 0, %s207
      %s222 = sphi 0, %s208
      %s226 = sphi 0, %s226
      %s228 = sphi 0, %s226
      %s229 = sphi 0, %s228
      %s243 = sphi 0, %s229
      %s247 = sphi 0, %s247
      %s249 = sphi 0, %s247
      %s250 = sphi 0, %s249
      %s264 = sphi 0, %s250
      %s268 = sphi 0, %s268
      %s270 = sphi 0, %s268
      %s271 = sphi 0, %s270
      %s285 = sphi 0, %s271
      %s289 = sphi 0, %s289
      %s291 = sphi 0, %s289
      %s292 = sphi 0, %s291
      %s306 = sphi 0, %s292
      %s312 = sphi 0, %s314
      %s315 = sphi 0, %s312
      %s316 = sphi 0, %s315
      %s332 = sphi 0, %s316
      %s338 = sphi 0, %s340
      %s341 = sphi 0, %s338
      %s342 = sphi 0, %s341
      %s358 = sphi 0, %s342
    $region4: #{forward.1} parent=1 // loop_header_branch
      %27 = sbr.rel (%p25) target = $region8
    $region5: #{forward.1} parent=1 // loop_body
      %s29 = ssub.s32 %s24, 1
      %s30 = ssub.s32 %s24, 2
      %s31 = sadd.s32 %s24, 1
      %s32 = ssub.s32 %s24, %s31
      %p33 = scmp.eq.s32.totalorder %s32, 0
      %s35 = sadd.s32 %s34, 1
      %s36 = scalar_select %p33, %s34, %s35
      %p39 = pneg %p33
      %p40 = scmp.eq.s32.totalorder %s24, 1
      %p41 = por %p39, %p40
      %p42 = scmp.ne.s32.totalorder %s34, %s37
      %p43 = scmp.eq.s32.totalorder %s24, 0
      %p44 = por %p42, %p43
      %p45 = scmp.ne.s32.totalorder %s34, %s37
      %p46 = scmp.eq.s32.totalorder %s29, 1
      %p47 = por %p45, %p46
      %p48 = scmp.ne.s32.totalorder %s37, %s38
      %p49 = scmp.eq.s32.totalorder %s29, 0
      %p50 = por %p48, %p49
      %p51 = scmp.ne.s32.totalorder %s37, %s38
      %p52 = scmp.eq.s32.totalorder %s30, 1
      %p53 = por %p51, %p52
      %p55 = scmp.ne.s32.totalorder %s38, %s54
      %p56 = scmp.eq.s32.totalorder %s30, 0
      %p57 = por %p55, %p56
      %s59 = sadd.s32 %s58, 1
      %p62 = scmp.eq.s32.totalorder %s24, 1
      %p63 = scmp.ne.s32.totalorder %s58, %s60
      %p64 = scmp.eq.s32.totalorder %s24, 0
      %p65 = por %p63, %p64
      %p66 = scmp.ne.s32.totalorder %s58, %s60
      %p67 = scmp.eq.s32.totalorder %s29, 1
      %p68 = por %p66, %p67
      %p69 = scmp.ne.s32.totalorder %s60, %s61
      %p70 = scmp.eq.s32.totalorder %s29, 0
      %p71 = por %p69, %p70
      %p72 = scmp.ne.s32.totalorder %s60, %s61
      %p73 = scmp.eq.s32.totalorder %s30, 1
      %p74 = por %p72, %p73
      %p76 = scmp.ne.s32.totalorder %s61, %s75
      %p77 = scmp.eq.s32.totalorder %s30, 0
      %p78 = por %p76, %p77
      %s80 = sadd.s32 %s79, 1
      %p83 = scmp.eq.s32.totalorder %s24, 1
      %p84 = scmp.ne.s32.totalorder %s79, %s81
      %p85 = scmp.eq.s32.totalorder %s24, 0
      %p86 = por %p84, %p85
      %p87 = scmp.ne.s32.totalorder %s79, %s81
      %p88 = scmp.eq.s32.totalorder %s29, 1
      %p89 = por %p87, %p88
      %p90 = scmp.ne.s32.totalorder %s81, %s82
      %p91 = scmp.eq.s32.totalorder %s29, 0
      %p92 = por %p90, %p91
      %p93 = scmp.ne.s32.totalorder %s81, %s82
      %p94 = scmp.eq.s32.totalorder %s30, 1
      %p95 = por %p93, %p94
      %p97 = scmp.ne.s32.totalorder %s82, %s96
      %p98 = scmp.eq.s32.totalorder %s30, 0
      %p99 = por %p97, %p98
      %s101 = sadd.s32 %s100, 1
      %p104 = scmp.eq.s32.totalorder %s24, 1
      %p105 = scmp.ne.s32.totalorder %s100, %s102
      %p106 = scmp.eq.s32.totalorder %s24, 0
      %p107 = por %p105, %p106
      %p108 = scmp.ne.s32.totalorder %s100, %s102
      %p109 = scmp.eq.s32.totalorder %s29, 1
      %p110 = por %p108, %p109
      %p111 = scmp.ne.s32.totalorder %s102, %s103
      %p112 = scmp.eq.s32.totalorder %s29, 0
      %p113 = por %p111, %p112
      %p114 = scmp.ne.s32.totalorder %s102, %s103
      %p115 = scmp.eq.s32.totalorder %s30, 1
      %p116 = por %p114, %p115
      %p118 = scmp.ne.s32.totalorder %s103, %s117
      %p119 = scmp.eq.s32.totalorder %s30, 0
      %p120 = por %p118, %p119
      %s122 = sadd.s32 %s121, 1
      %p125 = scmp.eq.s32.totalorder %s24, 1
      %p126 = scmp.ne.s32.totalorder %s121, %s123
      %p127 = scmp.eq.s32.totalorder %s24, 0
      %p128 = por %p126, %p127
      %p129 = scmp.ne.s32.totalorder %s121, %s123
      %p130 = scmp.eq.s32.totalorder %s29, 1
      %p131 = por %p129, %p130
      %p132 = scmp.ne.s32.totalorder %s123, %s124
      %p133 = scmp.eq.s32.totalorder %s29, 0
      %p134 = por %p132, %p133
      %p135 = scmp.ne.s32.totalorder %s123, %s124
      %p136 = scmp.eq.s32.totalorder %s30, 1
      %p137 = por %p135, %p136
      %p139 = scmp.ne.s32.totalorder %s124, %s138
      %p140 = scmp.eq.s32.totalorder %s30, 0
      %p141 = por %p139, %p140
      %s143 = sadd.s32 %s142, 1
      %p146 = scmp.eq.s32.totalorder %s24, 1
      %p147 = scmp.ne.s32.totalorder %s142, %s144
      %p148 = scmp.eq.s32.totalorder %s24, 0
      %p149 = por %p147, %p148
      %p150 = scmp.ne.s32.totalorder %s142, %s144
      %p151 = scmp.eq.s32.totalorder %s29, 1
      %p152 = por %p150, %p151
      %p153 = scmp.ne.s32.totalorder %s144, %s145
      %p154 = scmp.eq.s32.totalorder %s29, 0
      %p155 = por %p153, %p154
      %p156 = scmp.ne.s32.totalorder %s144, %s145
      %p157 = scmp.eq.s32.totalorder %s30, 1
      %p158 = por %p156, %p157
      %p160 = scmp.ne.s32.totalorder %s145, %s159
      %p161 = scmp.eq.s32.totalorder %s30, 0
      %p162 = por %p160, %p161
      %s164 = sadd.s32 %s163, 1
      %p167 = scmp.eq.s32.totalorder %s24, 1
      %p168 = scmp.ne.s32.totalorder %s163, %s165
      %p169 = scmp.eq.s32.totalorder %s24, 0
      %p170 = por %p168, %p169
      %p171 = scmp.ne.s32.totalorder %s163, %s165
      %p172 = scmp.eq.s32.totalorder %s29, 1
      %p173 = por %p171, %p172
      %p174 = scmp.ne.s32.totalorder %s165, %s166
      %p175 = scmp.eq.s32.totalorder %s29, 0
      %p176 = por %p174, %p175
      %p177 = scmp.ne.s32.totalorder %s165, %s166
      %p178 = scmp.eq.s32.totalorder %s30, 1
      %p179 = por %p177, %p178
      %p181 = scmp.ne.s32.totalorder %s166, %s180
      %p182 = scmp.eq.s32.totalorder %s30, 0
      %p183 = por %p181, %p182
      %s185 = sadd.s32 %s184, 1
      %p188 = scmp.eq.s32.totalorder %s24, 1
      %p189 = scmp.ne.s32.totalorder %s184, %s186
      %p190 = scmp.eq.s32.totalorder %s24, 0
      %p191 = por %p189, %p190
      %p192 = scmp.ne.s32.totalorder %s184, %s186
      %p193 = scmp.eq.s32.totalorder %s29, 1
      %p194 = por %p192, %p193
      %p195 = scmp.ne.s32.totalorder %s186, %s187
      %p196 = scmp.eq.s32.totalorder %s29, 0
      %p197 = por %p195, %p196
      %p198 = scmp.ne.s32.totalorder %s186, %s187
      %p199 = scmp.eq.s32.totalorder %s30, 1
      %p200 = por %p198, %p199
      %p202 = scmp.ne.s32.totalorder %s187, %s201
      %p203 = scmp.eq.s32.totalorder %s30, 0
      %p204 = por %p202, %p203
      %s206 = sadd.s32 %s205, 1
      %p209 = scmp.eq.s32.totalorder %s24, 1
      %p210 = scmp.ne.s32.totalorder %s205, %s207
      %p211 = scmp.eq.s32.totalorder %s24, 0
      %p212 = por %p210, %p211
      %p213 = scmp.ne.s32.totalorder %s205, %s207
      %p214 = scmp.eq.s32.totalorder %s29, 1
      %p215 = por %p213, %p214
      %p216 = scmp.ne.s32.totalorder %s207, %s208
      %p217 = scmp.eq.s32.totalorder %s29, 0
      %p218 = por %p216, %p217
      %p219 = scmp.ne.s32.totalorder %s207, %s208
      %p220 = scmp.eq.s32.totalorder %s30, 1
      %p221 = por %p219, %p220
      %p223 = scmp.ne.s32.totalorder %s208, %s222
      %p224 = scmp.eq.s32.totalorder %s30, 0
      %p225 = por %p223, %p224
      %s227 = sadd.s32 %s226, 1
      %p230 = scmp.eq.s32.totalorder %s24, 1
      %p231 = scmp.ne.s32.totalorder %s226, %s228
      %p232 = scmp.eq.s32.totalorder %s24, 0
      %p233 = por %p231, %p232
      %p234 = scmp.ne.s32.totalorder %s226, %s228
      %p235 = scmp.eq.s32.totalorder %s29, 1
      %p236 = por %p234, %p235
      %p237 = scmp.ne.s32.totalorder %s228, %s229
      %p238 = scmp.eq.s32.totalorder %s29, 0
      %p239 = por %p237, %p238
      %p240 = scmp.ne.s32.totalorder %s228, %s229
      %p241 = scmp.eq.s32.totalorder %s30, 1
      %p242 = por %p240, %p241
      %p244 = scmp.ne.s32.totalorder %s229, %s243
      %p245 = scmp.eq.s32.totalorder %s30, 0
      %p246 = por %p244, %p245
      %s248 = sadd.s32 %s247, 1
      %p251 = scmp.eq.s32.totalorder %s24, 1
      %p252 = scmp.ne.s32.totalorder %s247, %s249
      %p253 = scmp.eq.s32.totalorder %s24, 0
      %p254 = por %p252, %p253
      %p255 = scmp.ne.s32.totalorder %s247, %s249
      %p256 = scmp.eq.s32.totalorder %s29, 1
      %p257 = por %p255, %p256
      %p258 = scmp.ne.s32.totalorder %s249, %s250
      %p259 = scmp.eq.s32.totalorder %s29, 0
      %p260 = por %p258, %p259
      %p261 = scmp.ne.s32.totalorder %s249, %s250
      %p262 = scmp.eq.s32.totalorder %s30, 1
      %p263 = por %p261, %p262
      %p265 = scmp.ne.s32.totalorder %s250, %s264
      %p266 = scmp.eq.s32.totalorder %s30, 0
      %p267 = por %p265, %p266
      %s269 = sadd.s32 %s268, 1
      %p272 = scmp.eq.s32.totalorder %s24, 1
      %p273 = scmp.ne.s32.totalorder %s268, %s270
      %p274 = scmp.eq.s32.totalorder %s24, 0
      %p275 = por %p273, %p274
      %p276 = scmp.ne.s32.totalorder %s268, %s270
      %p277 = scmp.eq.s32.totalorder %s29, 1
      %p278 = por %p276, %p277
      %p279 = scmp.ne.s32.totalorder %s270, %s271
      %p280 = scmp.eq.s32.totalorder %s29, 0
      %p281 = por %p279, %p280
      %p282 = scmp.ne.s32.totalorder %s270, %s271
      %p283 = scmp.eq.s32.totalorder %s30, 1
      %p284 = por %p282, %p283
      %p286 = scmp.ne.s32.totalorder %s271, %s285
      %p287 = scmp.eq.s32.totalorder %s30, 0
      %p288 = por %p286, %p287
      %s290 = sadd.s32 %s289, 1
      %p293 = scmp.eq.s32.totalorder %s24, 1
      %p294 = scmp.ne.s32.totalorder %s289, %s291
      %p295 = scmp.eq.s32.totalorder %s24, 0
      %p296 = por %p294, %p295
      %p297 = scmp.ne.s32.totalorder %s289, %s291
      %p298 = scmp.eq.s32.totalorder %s29, 1
      %p299 = por %p297, %p298
      %p300 = scmp.ne.s32.totalorder %s291, %s292
      %p301 = scmp.eq.s32.totalorder %s29, 0
      %p302 = por %p300, %p301
      %p303 = scmp.ne.s32.totalorder %s291, %s292
      %p304 = scmp.eq.s32.totalorder %s30, 1
      %p305 = por %p303, %p304
      %p307 = scmp.ne.s32.totalorder %s292, %s306
      %p308 = scmp.eq.s32.totalorder %s30, 0
      %p309 = por %p307, %p308
      %s310 = ssub.s32 %s24, %s31
      %p311 = scmp.eq.s32.totalorder %s310, 0
      %s313 = sadd.s32 %s312, 1
      %s314 = scalar_select %p311, %s312, %s313
      %p317 = pneg %p311
      %p318 = scmp.eq.s32.totalorder %s24, 1
      %p319 = por %p317, %p318
      %p320 = scmp.ne.s32.totalorder %s312, %s315
      %p321 = scmp.eq.s32.totalorder %s24, 0
      %p322 = por %p320, %p321
      %p323 = scmp.ne.s32.totalorder %s312, %s315
      %p324 = scmp.eq.s32.totalorder %s29, 1
      %p325 = por %p323, %p324
      %p326 = scmp.ne.s32.totalorder %s315, %s316
      %p327 = scmp.eq.s32.totalorder %s29, 0
      %p328 = por %p326, %p327
      %p329 = scmp.ne.s32.totalorder %s315, %s316
      %p330 = scmp.eq.s32.totalorder %s30, 1
      %p331 = por %p329, %p330
      %p333 = scmp.ne.s32.totalorder %s316, %s332
      %p334 = scmp.eq.s32.totalorder %s30, 0
      %p335 = por %p333, %p334
      %s336 = ssub.s32 %s24, %s31
      %p337 = scmp.eq.s32.totalorder %s336, 0
      %s339 = sadd.s32 %s338, 1
      %s340 = scalar_select %p337, %s338, %s339
      %p343 = pneg %p337
      %p344 = scmp.eq.s32.totalorder %s24, 1
      %p345 = por %p343, %p344
      %p346 = scmp.ne.s32.totalorder %s338, %s341
      %p347 = scmp.eq.s32.totalorder %s24, 0
      %p348 = por %p346, %p347
      %p349 = scmp.ne.s32.totalorder %s338, %s341
      %p350 = scmp.eq.s32.totalorder %s29, 1
      %p351 = por %p349, %p350
      %p352 = scmp.ne.s32.totalorder %s341, %s342
      %p353 = scmp.eq.s32.totalorder %s29, 0
      %p354 = por %p352, %p353
      %p355 = scmp.ne.s32.totalorder %s341, %s342
      %p356 = scmp.eq.s32.totalorder %s30, 1
      %p357 = por %p355, %p356
      %p359 = scmp.ne.s32.totalorder %s342, %s358
      %p360 = scmp.eq.s32.totalorder %s30, 0
      %p361 = por %p359, %p360
      %p362 = scmp.le.s32.totalorder 1, %s24
      %p363 = scmp.lt.s32.totalorder %s24, 3
      %p364 = pnand %p362, %p363
      %p365 = pneg %p364
      // Predicated region
      $region9: #{forward.1} parent=5 // pred_check
        _
      $region10: #{forward.1} parent=5 // pred_check_branch
        %367 = sbr.rel (%p364) target = $region12
      $region11: #{forward.1} parent=5 // pred_region
        %s368 = ssub.s32 %s24, 1
        // Predicated region
        $region13: #{forward.1} parent=11 // pred_check
          %p369 = pneg %p71
        $region14: #{forward.1} parent=11 // pred_check_branch
          %371 = sbr.rel (%p369) target = $region16
        $region15: #{forward.1} parent=11 // pred_region
          %s373 = ssub.s32 2304, 2304
          %374 = vsyncadd [#allocation6], %s373
          %s375 = sshll.u32 [#allocation5], 4
          %s376 = int_to_ptr.vmem [resolvable:$true] %s375
          %381 = dma.hbm_to_vmem [thread:$0]  %s1, 2304, %s376, [#allocation6], 128, 128, 8
        $region16: #{forward.1} parent=11 // pred_fallthru
          _
        // Predicated region
        $region17: #{forward.1} parent=11 // pred_check
          %p382 = pneg %p92
        $region18: #{forward.1} parent=11 // pred_check_branch
          %384 = sbr.rel (%p382) target = $region20
        $region19: #{forward.1} parent=11 // pred_region
          _
        $region20: #{forward.1} parent=11 // pred_fallthru
          _
        // Predicated region
        $region21: #{forward.1} parent=11 // pred_check
          %p385 = pneg %p113
        $region22: #{forward.1} parent=11 // pred_check_branch
          %387 = sbr.rel (%p385) target = $region24
        $region23: #{forward.1} parent=11 // pred_region
          _
        $region24: #{forward.1} parent=11 // pred_fallthru
          _
        // Predicated region
        $region25: #{forward.1} parent=11 // pred_check
          %p388 = pneg %p134
        $region26: #{forward.1} parent=11 // pred_check_branch
          %390 = sbr.rel (%p388) target = $region28
        $region27: #{forward.1} parent=11 // pred_region
          _
        $region28: #{forward.1} parent=11 // pred_fallthru
          _
        // Predicated region
        $region29: #{forward.1} parent=11 // pred_check
          %p391 = pneg %p155
        $region30: #{forward.1} parent=11 // pred_check_branch
          %393 = sbr.rel (%p391) target = $region32
        $region31: #{forward.1} parent=11 // pred_region
          %s395 = ssub.s32 2304, 2304
          %396 = vsyncadd [#allocation8], %s395
          %s397 = sshll.u32 [#allocation7], 4
          %s398 = int_to_ptr.vmem [resolvable:$true] %s397
          %403 = dma.hbm_to_vmem [thread:$0]  %s5, 2304, %s398, [#allocation8], 128, 128, 8
        $region32: #{forward.1} parent=11 // pred_fallthru
          _
        // Predicated region
        $region33: #{forward.1} parent=11 // pred_check
          %p404 = pneg %p176
        $region34: #{forward.1} parent=11 // pred_check_branch
          %406 = sbr.rel (%p404) target = $region36
        $region35: #{forward.1} parent=11 // pred_region
          _
        $region36: #{forward.1} parent=11 // pred_fallthru
          _
        // Predicated region
        $region37: #{forward.1} parent=11 // pred_check
          %p407 = pneg %p197
        $region38: #{forward.1} parent=11 // pred_check_branch
          %409 = sbr.rel (%p407) target = $region40
        $region39: #{forward.1} parent=11 // pred_region
          %s411 = ssub.s32 3072, 3072
          %412 = vsyncadd [#allocation8], %s411
          %s413 = sshll.u32 [#allocation9], 4
          %s414 = int_to_ptr.vmem [resolvable:$true] %s413
          %419 = dma.hbm_to_vmem [thread:$0]  %s7, 3072, %s414, [#allocation8], 128, 128, 8
        $region40: #{forward.1} parent=11 // pred_fallthru
          _
        // Predicated region
        $region41: #{forward.1} parent=11 // pred_check
          %p420 = pneg %p218
        $region42: #{forward.1} parent=11 // pred_check_branch
          %422 = sbr.rel (%p420) target = $region44
        $region43: #{forward.1} parent=11 // pred_region
          _
        $region44: #{forward.1} parent=11 // pred_fallthru
          _
        // Predicated region
        $region45: #{forward.1} parent=11 // pred_check
          %p423 = pneg %p239
        $region46: #{forward.1} parent=11 // pred_check_branch
          %425 = sbr.rel (%p423) target = $region48
        $region47: #{forward.1} parent=11 // pred_region
          _
        $region48: #{forward.1} parent=11 // pred_fallthru
          _
        // Predicated region
        $region49: #{forward.1} parent=11 // pred_check
          %p426 = pneg %p260
        $region50: #{forward.1} parent=11 // pred_check_branch
          %428 = sbr.rel (%p426) target = $region52
        $region51: #{forward.1} parent=11 // pred_region
          _
        $region52: #{forward.1} parent=11 // pred_fallthru
          _
        // Predicated region
        $region53: #{forward.1} parent=11 // pred_check
          %p429 = pneg %p281
        $region54: #{forward.1} parent=11 // pred_check_branch
          %431 = sbr.rel (%p429) target = $region56
        $region55: #{forward.1} parent=11 // pred_region
          %s433 = ssub.s32 1536, 1536
          %434 = vsyncadd [#allocation11], %s433
          %s435 = sshll.u32 [#allocation10], 4
          %s436 = int_to_ptr.vmem [resolvable:$true] %s435
          %441 = dma.hbm_to_vmem [thread:$0]  %s11, 1536, %s436, [#allocation11], 128, 128, 8
        $region56: #{forward.1} parent=11 // pred_fallthru
          _
        // Predicated region
        $region57: #{forward.1} parent=11 // pred_check
          %p442 = pneg %p302
        $region58: #{forward.1} parent=11 // pred_check_branch
          %444 = sbr.rel (%p442) target = $region60
        $region59: #{forward.1} parent=11 // pred_region
          %s446 = ssub.s32 1536, 1536
          %447 = vsyncadd [#allocation11], %s446
          %s448 = sshll.u32 [#allocation12], 4
          %s449 = int_to_ptr.vmem [resolvable:$true] %s448
          %454 = dma.hbm_to_vmem [thread:$0]  %s12, 1536, %s449, [#allocation11], 128, 128, 8
        $region60: #{forward.1} parent=11 // pred_fallthru
          _
      $region12: #{forward.1} parent=5 // pred_fallthru
        _
      %p455 = scmp.lt.s32.totalorder %s24, 2
      // Predicated region
      $region61: #{forward.1} parent=5 // pred_check
        %p456 = pneg %p455
      $region62: #{forward.1} parent=5 // pred_check_branch
        %458 = sbr.rel (%p456) target = $region64
      $region63: #{forward.1} parent=5 // pred_region
        // Predicated region
        $region65: #{forward.1} parent=63 // pred_check
          %p459 = pneg %p44
        $region66: #{forward.1} parent=63 // pred_check_branch
          %461 = sbr.rel (%p459) target = $region68
        $region67: #{forward.1} parent=63 // pred_region
          %p462 = scmp.lt.s32.totalorder %s24, 1
          %s463 = scalar_select %p462, %s24, 1
          %s464 = smul.addr %s463, 2
          %s465 = smul.addr %s464, 8
          %s466 = scalar_lea.vmem %s0, %s465
        $region68: #{forward.1} parent=63 // pred_fallthru
          _
      $region64: #{forward.1} parent=5 // pred_fallthru
        _
      %p467 = scmp.le.s32.totalorder 1, %s24
      %p468 = scmp.lt.s32.totalorder %s24, 3
      %p469 = pnand %p467, %p468
      %p470 = pneg %p469
      // Predicated region
      $region69: #{forward.1} parent=5 // pred_check
        _
      $region70: #{forward.1} parent=5 // pred_check_branch
        %472 = sbr.rel (%p469) target = $region72
      $region71: #{forward.1} parent=5 // pred_region
        %s473 = ssub.s32 %s24, 1
        // Predicated region
        $region73: #{forward.1} parent=71 // pred_check
          %p474 = pneg %p71
        $region74: #{forward.1} parent=71 // pred_check_branch
          %476 = sbr.rel (%p474) target = $region76
        $region75: #{forward.1} parent=71 // pred_region
          %477 = dma.done [#allocation6], 2304
        $region76: #{forward.1} parent=71 // pred_fallthru
          _
        // Predicated region
        $region77: #{forward.1} parent=71 // pred_check
          %p478 = pneg %p155
        $region78: #{forward.1} parent=71 // pred_check_branch
          %480 = sbr.rel (%p478) target = $region80
        $region79: #{forward.1} parent=71 // pred_region
          %481 = dma.done [#allocation8], 2304
        $region80: #{forward.1} parent=71 // pred_fallthru
          _
        // Predicated region
        $region81: #{forward.1} parent=71 // pred_check
          %p482 = pneg %p197
        $region82: #{forward.1} parent=71 // pred_check_branch
          %484 = sbr.rel (%p482) target = $region84
        $region83: #{forward.1} parent=71 // pred_region
          %485 = dma.done [#allocation8], 3072
        $region84: #{forward.1} parent=71 // pred_fallthru
          _
        // Predicated region
        $region85: #{forward.1} parent=71 // pred_check
          %p486 = pneg %p281
        $region86: #{forward.1} parent=71 // pred_check_branch
          %488 = sbr.rel (%p486) target = $region88
        $region87: #{forward.1} parent=71 // pred_region
          %489 = dma.done [#allocation11], 1536
        $region88: #{forward.1} parent=71 // pred_fallthru
          _
        // Predicated region
        $region89: #{forward.1} parent=71 // pred_check
          %p490 = pneg %p302
        $region90: #{forward.1} parent=71 // pred_check_branch
          %492 = sbr.rel (%p490) target = $region92
        $region91: #{forward.1} parent=71 // pred_region
          %493 = dma.done [#allocation11], 1536
        $region92: #{forward.1} parent=71 // pred_fallthru
          _
        %p494 = scmp.lt.s32.totalorder %s29, 1
        %s495 = scalar_select %p494, %s29, 1
        %s496 = smul.addr %s495, 2
        %s497 = smul.addr %s496, 8
        %s498 = scalar_lea.vmem %s0, %s497
        %p499 = pneg %p50
        %p500 = pneg %p47
        %p501 = pneg %p71
        %p502 = pneg %p68
        %p503 = pneg %p92
        %p504 = pneg %p89
        %p505 = pneg %p113
        %p506 = pneg %p110
        %p507 = pneg %p134
        %p508 = pneg %p131
        %p509 = pneg %p155
        %p510 = pneg %p152
        %p511 = pneg %p176
        %p512 = pneg %p173
        %p513 = pneg %p197
        %p514 = pneg %p194
        %p515 = pneg %p218
        %p516 = pneg %p215
        %p517 = pneg %p239
        %p518 = pneg %p236
        %p519 = pneg %p260
        %p520 = pneg %p257
        %p521 = pneg %p281
        %p522 = pneg %p278
        %p523 = pneg %p302
        %p524 = pneg %p299
        %p525 = pneg %p328
        %p526 = pneg %p325
        %p527 = scmp.lt.s32.totalorder %s29, 1
        %s528 = scalar_select %p527, %s29, 1
        %s529 = smul.addr %s528, 2
        %s530 = smul.addr %s529, 8
        %s531 = scalar_lea.vmem %s13, %s530
        %p532 = pneg %p354
        %p533 = pneg %p351
        %p534 = scmp.lt.s32.totalorder %s29, 1
        %s535 = scalar_select %p534, %s29, 1
        %s536 = smul.addr %s535, 2
        %s537 = scalar_lea.vmem %s14, %s536
        %p538 = scmp.lt.s32.totalorder %s29, 1
        %s539 = scalar_select %p538, %s29, 1
        %s540 = smul.addr %s539, 2
        %s541 = smul.addr %s540, 8
        %s542 = scalar_lea.vmem %s0, %s541
        %p543 = scmp.lt.s32.totalorder %s29, 1
        %s544 = scalar_select %p543, %s29, 1
        %s545 = smul.addr %s544, 2
        %s546 = smul.addr %s545, 8
        %s547 = scalar_lea.vmem %s13, %s546
        %p548 = scmp.lt.s32.totalorder %s29, 1
        %s549 = scalar_select %p548, %s29, 1
        %s550 = smul.addr %s549, 2
        %s551 = scalar_lea.vmem %s14, %s550
        %v552 = vld [vmem:[%s542] sm:$0xff]
        %v553 = vld [vmem:[%s542 + $0x8] sm:$0x3f]
        %v554 = vld [vmem:[#allocation5] sm:$0xff]
        %v555 = vld [vmem:[#allocation5 + $0x8] sm:$0xff]
        %v556 = vld [vmem:[#allocation5 + $0x10] sm:$0xff]
        %v557 = vld [vmem:[#allocation5 + $0x18] sm:$0xff]
        %v558 = vld [vmem:[#allocation5 + $0x20] sm:$0xff]
        %v559 = vld [vmem:[#allocation5 + $0x28] sm:$0xff]
        %v560 = vld [vmem:[%s542 + $0x1] sm:$0xff]
        %v561 = vld [vmem:[%s542 + $0x9] sm:$0x3f]
        %s562 = scalar_lea.vmem [#allocation5], 48
        %v563 = vld [vmem:[%s562] sm:$0xff]
        %v564 = vld [vmem:[%s562 + $0x8] sm:$0xff]
        %v565 = vld [vmem:[%s562 + $0x10] sm:$0xff]
        %v566 = vld [vmem:[%s562 + $0x18] sm:$0xff]
        %v567 = vld [vmem:[%s562 + $0x20] sm:$0xff]
        %v568 = vld [vmem:[%s562 + $0x28] sm:$0xff]
        %vm569 = vcmask 392192
        %v571 = vsel %vm569, %v560, 0
        %v574 = vsel %vm569, %v561, 0
        %576 = vmatprep.subr.mxu0 0.0
        %577 = vmatpush1.msra.mxu0 %v563
        %578 = vmatprep.subr.mxu0 0.0
        %579 = vmatpush1.msra.mxu0 %v564
        %580 = vmatprep.subr.mxu0 0.0
        %581 = vmatpush1.msra.mxu0 %v565
        %582 = vmatprep.subr.mxu0 0.0
        %583 = vmatpush1.msra.mxu0 %v566
        %584 = vmatprep.subr.mxu0 0.0
        %585 = vmatpush1.msra.mxu0 %v567
        %586 = vmatprep.subr.mxu0 0.0
        %587 = vmatpush1.msra.mxu0 %v568
        %588 = vmatprep.subr.mxu0 0.0
        %589 = vmatpush1.msra.mxu0 0.0
        %590 = vmatprep.subr.mxu0 0.0
        %591 = vmatpush1.msra.mxu0 0.0
        %592 = vmatprep.subr.mxu0 0.0
        %593 = vmatpush1.msra.mxu0 0.0
        %594 = vmatprep.subr.mxu0 0.0
        %595 = vmatpush1.msra.mxu0 0.0
        %596 = vmatprep.subr.mxu0 0.0
        %597 = vmatpush1.msra.mxu0 0.0
        %598 = vmatprep.subr.mxu0 0.0
        %599 = vmatpush1.msra.mxu0 0.0
        %600 = vmatprep.subr.mxu0 0.0
        %601 = vmatpush1.msra.mxu0 0.0
        %602 = vmatprep.subr.mxu0 0.0
        %603 = vmatpush1.msra.mxu0 0.0
        %604 = vmatprep.subr.mxu0 0.0
        %605 = vmatpush1.msra.mxu0 0.0
        %606 = vmatprep.subr.mxu0 0.0
        %607 = vmatpush1.msra.mxu0 0.0
        %608 = vmatprep.subr.mxu0 0.0
        %609 = vmatpush1.msra.mxu0 0.0
        %610 = vmatprep.subr.mxu0 0.0
        %611 = vmatpush1.msra.mxu0 0.0
        %612 = vmatprep.subr.mxu0 0.0
        %613 = vmatpush1.msra.mxu0 0.0
        %614 = vmatprep.subr.mxu0 0.0
        %615 = vmatpush1.msra.mxu0 0.0
        %616 = vmatprep.subr.mxu0 0.0
        %617 = vmatpush1.msra.mxu0 0.0
        %618 = vmatprep.subr.mxu0 0.0
        %619 = vmatpush1.msra.mxu0 0.0
        %620 = vmatprep.subr.mxu0 0.0
        %621 = vmatpush1.msra.mxu0 0.0
        %622 = vmatprep.subr.mxu0 0.0
        %623 = vmatpush1.msra.mxu0 0.0
        %624 = vmatprep.subr.mxu0 0.0
        %625 = vmatpush1.msra.mxu0 0.0
        %626 = vmatprep.subr.mxu0 0.0
        %627 = vmatpush1.msra.mxu0 0.0
        %628 = vmatprep.subr.mxu0 0.0
        %629 = vmatpush1.msra.mxu0 0.0
        %630 = vmatprep.subr.mxu0 0.0
        %631 = vmatpush1.msra.mxu0 0.0
        %632 = vmatprep.subr.mxu0 0.0
        %633 = vmatpush1.msra.mxu0 0.0
        %634 = vmatprep.subr.mxu0 0.0
        %635 = vmatpush1.msra.mxu0 0.0
        %636 = vmatprep.subr.mxu0 0.0
        %637 = vmatpush1.msra.mxu0 0.0
        %638 = vmatprep.subr.mxu0 0.0
        %639 = vmatpush1.msra.mxu0 0.0
        %640 = vmatprep.mubr.f32.mxu0 0.0
        %641 = vmatmul.mubr.f32.gmra.mrb[0].mxu0 %v571
        %v642 = vpop.f32.mrb[0].mxu0
        %v643 = vadd.f32 0.0, %v642
        %v644 = vpop.f32.mrb[0].mxu0
        %645 = vmatprep.mubr.f32.mxu0 0.0
        %646 = vmatmul.mubr.f32.gmra.mrb[0].mxu0 %v574
        %v647 = vpop.f32.mrb[0].mxu0
        %v648 = vadd.f32 0.0, %v647
        %v649 = vpop.f32.mrb[0].mxu0
        %650 = vdwg.mxu0
        %v652 = vsel %vm569, %v552, 0
        %v655 = vsel %vm569, %v553, 0
        %657 = vmatprep.subr.mxu0 0.0
        %658 = vmatpush1.msra.mxu0 %v554
        %659 = vmatprep.subr.mxu0 0.0
        %660 = vmatpush1.msra.mxu0 %v555
        %661 = vmatprep.subr.mxu0 0.0
        %662 = vmatpush1.msra.mxu0 %v556
        %663 = vmatprep.subr.mxu0 0.0
        %664 = vmatpush1.msra.mxu0 %v557
        %665 = vmatprep.subr.mxu0 0.0
        %666 = vmatpush1.msra.mxu0 %v558
        %667 = vmatprep.subr.mxu0 0.0
        %668 = vmatpush1.msra.mxu0 %v559
        %669 = vmatprep.subr.mxu0 0.0
        %670 = vmatpush1.msra.mxu0 0.0
        %671 = vmatprep.subr.mxu0 0.0
        %672 = vmatpush1.msra.mxu0 0.0
        %673 = vmatprep.subr.mxu0 0.0
        %674 = vmatpush1.msra.mxu0 0.0
        %675 = vmatprep.subr.mxu0 0.0
        %676 = vmatpush1.msra.mxu0 0.0
        %677 = vmatprep.subr.mxu0 0.0
        %678 = vmatpush1.msra.mxu0 0.0
        %679 = vmatprep.subr.mxu0 0.0
        %680 = vmatpush1.msra.mxu0 0.0
        %681 = vmatprep.subr.mxu0 0.0
        %682 = vmatpush1.msra.mxu0 0.0
        %683 = vmatprep.subr.mxu0 0.0
        %684 = vmatpush1.msra.mxu0 0.0
        %685 = vmatprep.subr.mxu0 0.0
        %686 = vmatpush1.msra.mxu0 0.0
        %687 = vmatprep.subr.mxu0 0.0
        %688 = vmatpush1.msra.mxu0 0.0
        %689 = vmatprep.subr.mxu0 0.0
        %690 = vmatpush1.msra.mxu0 0.0
        %691 = vmatprep.subr.mxu0 0.0
        %692 = vmatpush1.msra.mxu0 0.0
        %693 = vmatprep.subr.mxu0 0.0
        %694 = vmatpush1.msra.mxu0 0.0
        %695 = vmatprep.subr.mxu0 0.0
        %696 = vmatpush1.msra.mxu0 0.0
        %697 = vmatprep.subr.mxu0 0.0
        %698 = vmatpush1.msra.mxu0 0.0
        %699 = vmatprep.subr.mxu0 0.0
        %700 = vmatpush1.msra.mxu0 0.0
        %701 = vmatprep.subr.mxu0 0.0
        %702 = vmatpush1.msra.mxu0 0.0
        %703 = vmatprep.subr.mxu0 0.0
        %704 = vmatpush1.msra.mxu0 0.0
        %705 = vmatprep.subr.mxu0 0.0
        %706 = vmatpush1.msra.mxu0 0.0
        %707 = vmatprep.subr.mxu0 0.0
        %708 = vmatpush1.msra.mxu0 0.0
        %709 = vmatprep.subr.mxu0 0.0
        %710 = vmatpush1.msra.mxu0 0.0
        %711 = vmatprep.subr.mxu0 0.0
        %712 = vmatpush1.msra.mxu0 0.0
        %713 = vmatprep.subr.mxu0 0.0
        %714 = vmatpush1.msra.mxu0 0.0
        %715 = vmatprep.subr.mxu0 0.0
        %716 = vmatpush1.msra.mxu0 0.0
        %717 = vmatprep.subr.mxu0 0.0
        %718 = vmatpush1.msra.mxu0 0.0
        %719 = vmatprep.subr.mxu0 0.0
        %720 = vmatpush1.msra.mxu0 0.0
        %721 = vmatprep.mubr.f32.mxu0 0.0
        %722 = vmatmul.mubr.f32.gmra.mrb[0].mxu0 %v652
        %v723 = vpop.f32.mrb[0].mxu0
        %v724 = vadd.f32 %v643, %v723
        %v725 = vpop.f32.mrb[0].mxu0
        %726 = vmatprep.mubr.f32.mxu0 0.0
        %727 = vmatmul.mubr.f32.gmra.mrb[0].mxu0 %v655
        %v728 = vpop.f32.mrb[0].mxu0
        %v729 = vadd.f32 %v648, %v728
        %v730 = vpop.f32.mrb[0].mxu0
        %731 = vdwg.mxu0
        %v732 = vld [vmem:[%s542 + $0x2] sm:$0xff]
        %v733 = vld [vmem:[%s542 + $0xa] sm:$0x3f]
        %s734 = scalar_lea.vmem [#allocation5], 96
        %v735 = vld [vmem:[%s734] sm:$0xff]
        %v736 = vld [vmem:[%s734 + $0x8] sm:$0xff]
        %v737 = vld [vmem:[%s734 + $0x10] sm:$0xff]
        %v738 = vld [vmem:[%s734 + $0x18] sm:$0xff]
        %v739 = vld [vmem:[%s734 + $0x20] sm:$0xff]
        %v740 = vld [vmem:[%s734 + $0x28] sm:$0xff]
        %v742 = vsel %vm569, %v732, 0
        %v745 = vsel %vm569, %v733, 0
        %747 = vmatprep.subr.mxu0 0.0
        %748 = vmatpush1.msra.mxu0 %v735
        %749 = vmatprep.subr.mxu0 0.0
        %750 = vmatpush1.msra.mxu0 %v736
        %751 = vmatprep.subr.mxu0 0.0
        %752 = vmatpush1.msra.mxu0 %v737
        %753 = vmatprep.subr.mxu0 0.0
        %754 = vmatpush1.msra.mxu0 %v738
        %755 = vmatprep.subr.mxu0 0.0
        %756 = vmatpush1.msra.mxu0 %v739
        %757 = vmatprep.subr.mxu0 0.0
        %758 = vmatpush1.msra.mxu0 %v740
        %759 = vmatprep.subr.mxu0 0.0
        %760 = vmatpush1.msra.mxu0 0.0
        %761 = vmatprep.subr.mxu0 0.0
        %762 = vmatpush1.msra.mxu0 0.0
        %763 = vmatprep.subr.mxu0 0.0
        %764 = vmatpush1.msra.mxu0 0.0
        %765 = vmatprep.subr.mxu0 0.0
        %766 = vmatpush1.msra.mxu0 0.0
        %767 = vmatprep.subr.mxu0 0.0
        %768 = vmatpush1.msra.mxu0 0.0
        %769 = vmatprep.subr.mxu0 0.0
        %770 = vmatpush1.msra.mxu0 0.0
        %771 = vmatprep.subr.mxu0 0.0
        %772 = vmatpush1.msra.mxu0 0.0
        %773 = vmatprep.subr.mxu0 0.0
        %774 = vmatpush1.msra.mxu0 0.0
        %775 = vmatprep.subr.mxu0 0.0
        %776 = vmatpush1.msra.mxu0 0.0
        %777 = vmatprep.subr.mxu0 0.0
        %778 = vmatpush1.msra.mxu0 0.0
        %779 = vmatprep.subr.mxu0 0.0
        %780 = vmatpush1.msra.mxu0 0.0
        %781 = vmatprep.subr.mxu0 0.0
        %782 = vmatpush1.msra.mxu0 0.0
        %783 = vmatprep.subr.mxu0 0.0
        %784 = vmatpush1.msra.mxu0 0.0
        %785 = vmatprep.subr.mxu0 0.0
        %786 = vmatpush1.msra.mxu0 0.0
        %787 = vmatprep.subr.mxu0 0.0
        %788 = vmatpush1.msra.mxu0 0.0
        %789 = vmatprep.subr.mxu0 0.0
        %790 = vmatpush1.msra.mxu0 0.0
        %791 = vmatprep.subr.mxu0 0.0
        %792 = vmatpush1.msra.mxu0 0.0
        %793 = vmatprep.subr.mxu0 0.0
        %794 = vmatpush1.msra.mxu0 0.0
        %795 = vmatprep.subr.mxu0 0.0
        %796 = vmatpush1.msra.mxu0 0.0
        %797 = vmatprep.subr.mxu0 0.0
        %798 = vmatpush1.msra.mxu0 0.0
        %799 = vmatprep.subr.mxu0 0.0
        %800 = vmatpush1.msra.mxu0 0.0
        %801 = vmatprep.subr.mxu0 0.0
        %802 = vmatpush1.msra.mxu0 0.0
        %803 = vmatprep.subr.mxu0 0.0
        %804 = vmatpush1.msra.mxu0 0.0
        %805 = vmatprep.subr.mxu0 0.0
        %806 = vmatpush1.msra.mxu0 0.0
        %807 = vmatprep.subr.mxu0 0.0
        %808 = vmatpush1.msra.mxu0 0.0
        %809 = vmatprep.subr.mxu0 0.0
        %810 = vmatpush1.msra.mxu0 0.0
        %811 = vmatprep.mubr.f32.mxu0 0.0
        %812 = vmatmul.mubr.f32.gmra.mrb[0].mxu0 %v742
        %v813 = vpop.f32.mrb[0].mxu0
        %v814 = vadd.f32 0.0, %v813
        %v815 = vpop.f32.mrb[0].mxu0
        %816 = vmatprep.mubr.f32.mxu0 0.0
        %817 = vmatmul.mubr.f32.gmra.mrb[0].mxu0 %v745
        %v818 = vpop.f32.mrb[0].mxu0
        %v819 = vadd.f32 0.0, %v818
        %v820 = vpop.f32.mrb[0].mxu0
        %821 = vdwg.mxu0
        %v822 = vadd.f32 %v724, %v814
        %v823 = vadd.f32 %v729, %v819
        %v824 = vld [vmem:[%s2] sm:$0x1]
        %v826 = vlaneseq
        %v827 = vshrl.u32 %v826, 7
        %v828 = vsub.s32 0, %v827
        %v829 = vrot.slane %v824, %v828
        %v831 = vadd.f32 %v822, %v829
        %v832 = vadd.f32 %v823, %v829
        %v833 = vmax.f32 %v831, 0.0
        %v834 = vmax.f32 %v832, 0.0
        %vm835 = vcmask 916480
        %836 = vst.msk [vmem:[#allocation2] sm:$0xff] %vm835, %v833
        %vm837 = vcmask 914432
        %838 = vst.msk [vmem:[#allocation2 + $0x8] sm:$0x3f] %vm837, %v834
        %v839 = vld [vmem:[#allocation2] sm:$0xff]
        %v840 = vld [vmem:[#allocation2 + $0x8] sm:$0xf]
        %v841 = vld [vmem:[%s3] sm:$0xff]
        %v842 = vld [vmem:[%s3 + $0x8] sm:$0xff]
        %v843 = vld [vmem:[%s3 + $0x10] sm:$0xff]
        %v844 = vld [vmem:[%s3 + $0x18] sm:$0xff]
        %v845 = vld [vmem:[%s3 + $0x20] sm:$0xff]
        %v846 = vld [vmem:[%s3 + $0x28] sm:$0xff]
        %v847 = vld [vmem:[%s3 + $0x30] sm:$0xff]
        %v848 = vld [vmem:[%s3 + $0x38] sm:$0xff]
        %v849 = vld [vmem:[%s3 + $0x40] sm:$0xff]
        %v850 = vld [vmem:[%s3 + $0x48] sm:$0xff]
        %v851 = vld [vmem:[%s3 + $0x50] sm:$0xff]
        %v852 = vld [vmem:[%s3 + $0x58] sm:$0xff]
        %v853 = vld [vmem:[%s3 + $0x60] sm:$0xff]
        %v854 = vld [vmem:[%s3 + $0x68] sm:$0xff]
        %v855 = vld [vmem:[#allocation2 + $0x1] sm:$0xff]
        %v856 = vld [vmem:[#allocation2 + $0x9] sm:$0xf]
        %s857 = scalar_lea.vmem %s3, 112
        %v858 = vld [vmem:[%s857] sm:$0xff]
        %v859 = vld [vmem:[%s857 + $0x8] sm:$0xff]
        %v860 = vld [vmem:[%s857 + $0x10] sm:$0xff]
        %v861 = vld [vmem:[%s857 + $0x18] sm:$0xff]
        %v862 = vld [vmem:[%s857 + $0x20] sm:$0xff]
        %v863 = vld [vmem:[%s857 + $0x28] sm:$0xff]
        %v864 = vld [vmem:[%s857 + $0x30] sm:$0xff]
        %v865 = vld [vmem:[%s857 + $0x38] sm:$0xff]
        %v866 = vld [vmem:[%s857 + $0x40] sm:$0xff]
        %v867 = vld [vmem:[%s857 + $0x48] sm:$0xff]
        %v868 = vld [vmem:[%s857 + $0x50] sm:$0xff]
        %v869 = vld [vmem:[%s857 + $0x58] sm:$0xff]
        %v870 = vld [vmem:[%s857 + $0x60] sm:$0xff]
        %v871 = vld [vmem:[%s857 + $0x68] sm:$0xff]
        %v873 = vsel %vm835, %v855, 0
        %v876 = vsel %vm835, %v856, 0
        %878 = vmatprep.subr.mxu0 0.0
        %879 = vmatpush1.msra.mxu0 %v858
        %880 = vmatprep.subr.mxu0 0.0
        %881 = vmatpush1.msra.mxu0 %v859
        %882 = vmatprep.subr.mxu0 0.0
        %883 = vmatpush1.msra.mxu0 %v860
        %884 = vmatprep.subr.mxu0 0.0
        %885 = vmatpush1.msra.mxu0 %v861
        %886 = vmatprep.subr.mxu0 0.0
        %887 = vmatpush1.msra.mxu0 %v862
        %888 = vmatprep.subr.mxu0 0.0
        %889 = vmatpush1.msra.mxu0 %v863
        %890 = vmatprep.subr.mxu0 0.0
        %891 = vmatpush1.msra.mxu0 %v864
        %892 = vmatprep.subr.mxu0 0.0
        %893 = vmatpush1.msra.mxu0 %v865
        %894 = vmatprep.subr.mxu0 0.0
        %895 = vmatpush1.msra.mxu0 %v866
        %896 = vmatprep.subr.mxu0 0.0
        %897 = vmatpush1.msra.mxu0 %v867
        %898 = vmatprep.subr.mxu0 0.0
        %899 = vmatpush1.msra.mxu0 %v868
        %900 = vmatprep.subr.mxu0 0.0
        %901 = vmatpush1.msra.mxu0 %v869
        %902 = vmatprep.subr.mxu0 0.0
        %903 = vmatpush1.msra.mxu0 %v870
        %904 = vmatprep.subr.mxu0 0.0
        %905 = vmatpush1.msra.mxu0 %v871
        %906 = vmatprep.subr.mxu0 0.0
        %907 = vmatpush1.msra.mxu0 0.0
        %908 = vmatprep.subr.mxu0 0.0
        %909 = vmatpush1.msra.mxu0 0.0
        %910 = vmatprep.subr.mxu0 0.0
        %911 = vmatpush1.msra.mxu0 0.0
        %912 = vmatprep.subr.mxu0 0.0
        %913 = vmatpush1.msra.mxu0 0.0
        %914 = vmatprep.subr.mxu0 0.0
        %915 = vmatpush1.msra.mxu0 0.0
        %916 = vmatprep.subr.mxu0 0.0
        %917 = vmatpush1.msra.mxu0 0.0
        %918 = vmatprep.subr.mxu0 0.0
        %919 = vmatpush1.msra.mxu0 0.0
        %920 = vmatprep.subr.mxu0 0.0
        %921 = vmatpush1.msra.mxu0 0.0
        %922 = vmatprep.subr.mxu0 0.0
        %923 = vmatpush1.msra.mxu0 0.0
        %924 = vmatprep.subr.mxu0 0.0
        %925 = vmatpush1.msra.mxu0 0.0
        %926 = vmatprep.subr.mxu0 0.0
        %927 = vmatpush1.msra.mxu0 0.0
        %928 = vmatprep.subr.mxu0 0.0
        %929 = vmatpush1.msra.mxu0 0.0
        %930 = vmatprep.subr.mxu0 0.0
        %931 = vmatpush1.msra.mxu0 0.0
        %932 = vmatprep.subr.mxu0 0.0
        %933 = vmatpush1.msra.mxu0 0.0
        %934 = vmatprep.subr.mxu0 0.0
        %935 = vmatpush1.msra.mxu0 0.0
        %936 = vmatprep.subr.mxu0 0.0
        %937 = vmatpush1.msra.mxu0 0.0
        %938 = vmatprep.subr.mxu0 0.0
        %939 = vmatpush1.msra.mxu0 0.0
        %940 = vmatprep.subr.mxu0 0.0
        %941 = vmatpush1.msra.mxu0 0.0
        %942 = vmatprep.mubr.f32.mxu0 0.0
        %943 = vmatmul.mubr.f32.gmra.mrb[0].mxu0 %v873
        %v944 = vpop.f32.mrb[0].mxu0
        %v945 = vadd.f32 0.0, %v944
        %v946 = vpop.f32.mrb[0].mxu0
        %947 = vmatprep.mubr.f32.mxu0 0.0
        %948 = vmatmul.mubr.f32.gmra.mrb[0].mxu0 %v876
        %v949 = vpop.f32.mrb[0].mxu0
        %v950 = vadd.f32 0.0, %v949
        %v951 = vpop.f32.mrb[0].mxu0
        %952 = vdwg.mxu0
        %v954 = vsel %vm835, %v839, 0
        %v957 = vsel %vm835, %v840, 0
        %959 = vmatprep.subr.mxu0 0.0
        %960 = vmatpush1.msra.mxu0 %v841
        %961 = vmatprep.subr.mxu0 0.0
        %962 = vmatpush1.msra.mxu0 %v842
        %963 = vmatprep.subr.mxu0 0.0
        %964 = vmatpush1.msra.mxu0 %v843
        %965 = vmatprep.subr.mxu0 0.0
        %966 = vmatpush1.msra.mxu0 %v844
        %967 = vmatprep.subr.mxu0 0.0
        %968 = vmatpush1.msra.mxu0 %v845
        %969 = vmatprep.subr.mxu0 0.0
        %970 = vmatpush1.msra.mxu0 %v846
        %971 = vmatprep.subr.mxu0 0.0
        %972 = vmatpush1.msra.mxu0 %v847
        %973 = vmatprep.subr.mxu0 0.0
        %974 = vmatpush1.msra.mxu0 %v848
        %975 = vmatprep.subr.mxu0 0.0
        %976 = vmatpush1.msra.mxu0 %v849
        %977 = vmatprep.subr.mxu0 0.0
        %978 = vmatpush1.msra.mxu0 %v850
        %979 = vmatprep.subr.mxu0 0.0
        %980 = vmatpush1.msra.mxu0 %v851
        %981 = vmatprep.subr.mxu0 0.0
        %982 = vmatpush1.msra.mxu0 %v852
        %983 = vmatprep.subr.mxu0 0.0
        %984 = vmatpush1.msra.mxu0 %v853
        %985 = vmatprep.subr.mxu0 0.0
        %986 = vmatpush1.msra.mxu0 %v854
        %987 = vmatprep.subr.mxu0 0.0
        %988 = vmatpush1.msra.mxu0 0.0
        %989 = vmatprep.subr.mxu0 0.0
        %990 = vmatpush1.msra.mxu0 0.0
        %991 = vmatprep.subr.mxu0 0.0
        %992 = vmatpush1.msra.mxu0 0.0
        %993 = vmatprep.subr.mxu0 0.0
        %994 = vmatpush1.msra.mxu0 0.0
        %995 = vmatprep.subr.mxu0 0.0
        %996 = vmatpush1.msra.mxu0 0.0
        %997 = vmatprep.subr.mxu0 0.0
        %998 = vmatpush1.msra.mxu0 0.0
        %999 = vmatprep.subr.mxu0 0.0
        %1000 = vmatpush1.msra.mxu0 0.0
        %1001 = vmatprep.subr.mxu0 0.0
        %1002 = vmatpush1.msra.mxu0 0.0
        %1003 = vmatprep.subr.mxu0 0.0
        %1004 = vmatpush1.msra.mxu0 0.0
        %1005 = vmatprep.subr.mxu0 0.0
        %1006 = vmatpush1.msra.mxu0 0.0
        %1007 = vmatprep.subr.mxu0 0.0
        %1008 = vmatpush1.msra.mxu0 0.0
        %1009 = vmatprep.subr.mxu0 0.0
        %1010 = vmatpush1.msra.mxu0 0.0
        %1011 = vmatprep.subr.mxu0 0.0
        %1012 = vmatpush1.msra.mxu0 0.0
        %1013 = vmatprep.subr.mxu0 0.0
        %1014 = vmatpush1.msra.mxu0 0.0
        %1015 = vmatprep.subr.mxu0 0.0
        %1016 = vmatpush1.msra.mxu0 0.0
        %1017 = vmatprep.subr.mxu0 0.0
        %1018 = vmatpush1.msra.mxu0 0.0
        %1019 = vmatprep.subr.mxu0 0.0
        %1020 = vmatpush1.msra.mxu0 0.0
        %1021 = vmatprep.subr.mxu0 0.0
        %1022 = vmatpush1.msra.mxu0 0.0
        %1023 = vmatprep.mubr.f32.mxu0 0.0
        %1024 = vmatmul.mubr.f32.gmra.mrb[0].mxu0 %v954
        %v1025 = vpop.f32.mrb[0].mxu0
        %v1026 = vadd.f32 %v945, %v1025
        %v1027 = vpop.f32.mrb[0].mxu0
        %1028 = vmatprep.mubr.f32.mxu0 0.0
        %1029 = vmatmul.mubr.f32.gmra.mrb[0].mxu0 %v957
        %v1030 = vpop.f32.mrb[0].mxu0
        %v1031 = vadd.f32 %v950, %v1030
        %v1032 = vpop.f32.mrb[0].mxu0
        %1033 = vdwg.mxu0
        %v1034 = vld [vmem:[#allocation2 + $0x2] sm:$0xff]
        %v1035 = vld [vmem:[#allocation2 + $0xa] sm:$0xf]
        %s1036 = scalar_lea.vmem %s3, 224
        %v1037 = vld [vmem:[%s1036] sm:$0xff]
        %v1038 = vld [vmem:[%s1036 + $0x8] sm:$0xff]
        %v1039 = vld [vmem:[%s1036 + $0x10] sm:$0xff]
        %v1040 = vld [vmem:[%s1036 + $0x18] sm:$0xff]
        %v1041 = vld [vmem:[%s1036 + $0x20] sm:$0xff]
        %v1042 = vld [vmem:[%s1036 + $0x28] sm:$0xff]
        %v1043 = vld [vmem:[%s1036 + $0x30] sm:$0xff]
        %v1044 = vld [vmem:[%s1036 + $0x38] sm:$0xff]
        %v1045 = vld [vmem:[%s1036 + $0x40] sm:$0xff]
        %v1046 = vld [vmem:[%s1036 + $0x48] sm:$0xff]
        %v1047 = vld [vmem:[%s1036 + $0x50] sm:$0xff]
        %v1048 = vld [vmem:[%s1036 + $0x58] sm:$0xff]
        %v1049 = vld [vmem:[%s1036 + $0x60] sm:$0xff]
        %v1050 = vld [vmem:[%s1036 + $0x68] sm:$0xff]
        %v1052 = vsel %vm835, %v1034, 0
        %v1055 = vsel %vm835, %v1035, 0
        %1057 = vmatprep.subr.mxu0 0.0
        %1058 = vmatpush1.msra.mxu0 %v1037
        %1059 = vmatprep.subr.mxu0 0.0
        %1060 = vmatpush1.msra.mxu0 %v1038
        %1061 = vmatprep.subr.mxu0 0.0
        %1062 = vmatpush1.msra.mxu0 %v1039
        %1063 = vmatprep.subr.mxu0 0.0
        %1064 = vmatpush1.msra.mxu0 %v1040
        %1065 = vmatprep.subr.mxu0 0.0
        %1066 = vmatpush1.msra.mxu0 %v1041
        %1067 = vmatprep.subr.mxu0 0.0
        %1068 = vmatpush1.msra.mxu0 %v1042
        %1069 = vmatprep.subr.mxu0 0.0
        %1070 = vmatpush1.msra.mxu0 %v1043
        %1071 = vmatprep.subr.mxu0 0.0
        %1072 = vmatpush1.msra.mxu0 %v1044
        %1073 = vmatprep.subr.mxu0 0.0
        %1074 = vmatpush1.msra.mxu0 %v1045
        %1075 = vmatprep.subr.mxu0 0.0
        %1076 = vmatpush1.msra.mxu0 %v1046
        %1077 = vmatprep.subr.mxu0 0.0
        %1078 = vmatpush1.msra.mxu0 %v1047
        %1079 = vmatprep.subr.mxu0 0.0
        %1080 = vmatpush1.msra.mxu0 %v1048
        %1081 = vmatprep.subr.mxu0 0.0
        %1082 = vmatpush1.msra.mxu0 %v1049
        %1083 = vmatprep.subr.mxu0 0.0
        %1084 = vmatpush1.msra.mxu0 %v1050
        %1085 = vmatprep.subr.mxu0 0.0
        %1086 = vmatpush1.msra.mxu0 0.0
        %1087 = vmatprep.subr.mxu0 0.0
        %1088 = vmatpush1.msra.mxu0 0.0
        %1089 = vmatprep.subr.mxu0 0.0
        %1090 = vmatpush1.msra.mxu0 0.0
        %1091 = vmatprep.subr.mxu0 0.0
        %1092 = vmatpush1.msra.mxu0 0.0
        %1093 = vmatprep.subr.mxu0 0.0
        %1094 = vmatpush1.msra.mxu0 0.0
        %1095 = vmatprep.subr.mxu0 0.0
        %1096 = vmatpush1.msra.mxu0 0.0
        %1097 = vmatprep.subr.mxu0 0.0
        %1098 = vmatpush1.msra.mxu0 0.0
        %1099 = vmatprep.subr.mxu0 0.0
        %1100 = vmatpush1.msra.mxu0 0.0
        %1101 = vmatprep.subr.mxu0 0.0
        %1102 = vmatpush1.msra.mxu0 0.0
        %1103 = vmatprep.subr.mxu0 0.0
        %1104 = vmatpush1.msra.mxu0 0.0
        %1105 = vmatprep.subr.mxu0 0.0
        %1106 = vmatpush1.msra.mxu0 0.0
        %1107 = vmatprep.subr.mxu0 0.0
        %1108 = vmatpush1.msra.mxu0 0.0
        %1109 = vmatprep.subr.mxu0 0.0
        %1110 = vmatpush1.msra.mxu0 0.0
        %1111 = vmatprep.subr.mxu0 0.0
        %1112 = vmatpush1.msra.mxu0 0.0
        %1113 = vmatprep.subr.mxu0 0.0
        %1114 = vmatpush1.msra.mxu0 0.0
        %1115 = vmatprep.subr.mxu0 0.0
        %1116 = vmatpush1.msra.mxu0 0.0
        %1117 = vmatprep.subr.mxu0 0.0
        %1118 = vmatpush1.msra.mxu0 0.0
        %1119 = vmatprep.subr.mxu0 0.0
        %1120 = vmatpush1.msra.mxu0 0.0
        %1121 = vmatprep.mubr.f32.mxu0 0.0
        %1122 = vmatmul.mubr.f32.gmra.mrb[0].mxu0 %v1052
        %v1123 = vpop.f32.mrb[0].mxu0
        %v1124 = vadd.f32 0.0, %v1123
        %v1125 = vpop.f32.mrb[0].mxu0
        %1126 = vmatprep.mubr.f32.mxu0 0.0
        %1127 = vmatmul.mubr.f32.gmra.mrb[0].mxu0 %v1055
        %v1128 = vpop.f32.mrb[0].mxu0
        %v1129 = vadd.f32 0.0, %v1128
        %v1130 = vpop.f32.mrb[0].mxu0
        %1131 = vdwg.mxu0
        %v1132 = vadd.f32 %v1026, %v1124
        %v1133 = vadd.f32 %v1031, %v1129
        %v1134 = vld [vmem:[%s4] sm:$0x1]
        %v1136 = vlaneseq
        %v1137 = vshrl.u32 %v1136, 7
        %v1138 = vsub.s32 0, %v1137
        %v1139 = vrot.slane %v1134, %v1138
        %v1141 = vadd.f32 %v1132, %v1139
        %v1142 = vadd.f32 %v1133, %v1139
        %v1143 = vmax.f32 %v1141, 0.0
        %v1144 = vmax.f32 %v1142, 0.0
        %vm1145 = vcmask 785408
        %1146 = vst.msk [vmem:[%s547] sm:$0xff] %vm1145, %v1143
        %vm1147 = vcmask 781312
        %1148 = vst.msk [vmem:[%s547 + $0x8] sm:$0xf] %vm1147, %v1144
        %v1149 = vld [vmem:[%s9] sm:$0x3f]
        %vm1150 = vcmask 97280
        %v1152 = vsel %vm1150, %v1149, 0
        %vm1154 = vcmask 1043456
        %v1156 = vsel %vm1154, %v1144, 0
        %1158 = vmatprep.subr.mxu0 0.0
        %1159 = vmatpush1.msra.mxu0 %v1143
        %1160 = vmatprep.subr.mxu0 0.0
        %1161 = vmatpush1.msra.mxu0 %v1156
        %1162 = vmatprep.subr.mxu0 0.0
        %1163 = vmatpush1.msra.mxu0 0.0
        %1164 = vmatprep.subr.mxu0 0.0
        %1165 = vmatpush1.msra.mxu0 0.0
        %1166 = vmatprep.subr.mxu0 0.0
        %1167 = vmatpush1.msra.mxu0 0.0
        %1168 = vmatprep.subr.mxu0 0.0
        %1169 = vmatpush1.msra.mxu0 0.0
        %1170 = vmatprep.subr.mxu0 0.0
        %1171 = vmatpush1.msra.mxu0 0.0
        %1172 = vmatprep.subr.mxu0 0.0
        %1173 = vmatpush1.msra.mxu0 0.0
        %1174 = vmatprep.subr.mxu0 0.0
        %1175 = vmatpush1.msra.mxu0 0.0
        %1176 = vmatprep.subr.mxu0 0.0
        %1177 = vmatpush1.msra.mxu0 0.0
        %1178 = vmatprep.subr.mxu0 0.0
        %1179 = vmatpush1.msra.mxu0 0.0
        %1180 = vmatprep.subr.mxu0 0.0
        %1181 = vmatpush1.msra.mxu0 0.0
        %1182 = vmatprep.subr.mxu0 0.0
        %1183 = vmatpush1.msra.mxu0 0.0
        %1184 = vmatprep.subr.mxu0 0.0
        %1185 = vmatpush1.msra.mxu0 0.0
        %1186 = vmatprep.subr.mxu0 0.0
        %1187 = vmatpush1.msra.mxu0 0.0
        %1188 = vmatprep.subr.mxu0 0.0
        %1189 = vmatpush1.msra.mxu0 0.0
        %1190 = vmatprep.subr.mxu0 0.0
        %1191 = vmatpush1.msra.mxu0 0.0
        %1192 = vmatprep.subr.mxu0 0.0
        %1193 = vmatpush1.msra.mxu0 0.0
        %1194 = vmatprep.subr.mxu0 0.0
        %1195 = vmatpush1.msra.mxu0 0.0
        %1196 = vmatprep.subr.mxu0 0.0
        %1197 = vmatpush1.msra.mxu0 0.0
        %1198 = vmatprep.subr.mxu0 0.0
        %1199 = vmatpush1.msra.mxu0 0.0
        %1200 = vmatprep.subr.mxu0 0.0
        %1201 = vmatpush1.msra.mxu0 0.0
        %1202 = vmatprep.subr.mxu0 0.0
        %1203 = vmatpush1.msra.mxu0 0.0
        %1204 = vmatprep.subr.mxu0 0.0
        %1205 = vmatpush1.msra.mxu0 0.0
        %1206 = vmatprep.subr.mxu0 0.0
        %1207 = vmatpush1.msra.mxu0 0.0
        %1208 = vmatprep.subr.mxu0 0.0
        %1209 = vmatpush1.msra.mxu0 0.0
        %1210 = vmatprep.subr.mxu0 0.0
        %1211 = vmatpush1.msra.mxu0 0.0
        %1212 = vmatprep.subr.mxu0 0.0
        %1213 = vmatpush1.msra.mxu0 0.0
        %1214 = vmatprep.subr.mxu0 0.0
        %1215 = vmatpush1.msra.mxu0 0.0
        %1216 = vmatprep.subr.mxu0 0.0
        %1217 = vmatpush1.msra.mxu0 0.0
        %1218 = vmatprep.subr.mxu0 0.0
        %1219 = vmatpush1.msra.mxu0 0.0
        %1220 = vmatprep.subr.mxu0 0.0
        %1221 = vmatpush1.msra.mxu0 0.0
        %1222 = vmatprep.mubr.f32.mxu0 0.0
        %1223 = vmatmul.mubr.f32.gmra.mrb[0].mxu0 %v1152
        %v1224 = vpop.f32.mrb[0].mxu0
        %v1225 = vadd.f32 0.0, %v1224
        %v1226 = vpop.f32.mrb[0].mxu0
        %1227 = vdwg.mxu0
        %v1228 = vld [vmem:[%s10] sm:$0x3f]
        %v1230 = vsel %vm1150, %v1228, 0
        %1232 = vmatprep.subr.mxu0 0.0
        %1233 = vmatpush1.msra.mxu0 %v1143
        %1234 = vmatprep.subr.mxu0 0.0
        %1235 = vmatpush1.msra.mxu0 %v1156
        %1236 = vmatprep.subr.mxu0 0.0
        %1237 = vmatpush1.msra.mxu0 0.0
        %1238 = vmatprep.subr.mxu0 0.0
        %1239 = vmatpush1.msra.mxu0 0.0
        %1240 = vmatprep.subr.mxu0 0.0
        %1241 = vmatpush1.msra.mxu0 0.0
        %1242 = vmatprep.subr.mxu0 0.0
        %1243 = vmatpush1.msra.mxu0 0.0
        %1244 = vmatprep.subr.mxu0 0.0
        %1245 = vmatpush1.msra.mxu0 0.0
        %1246 = vmatprep.subr.mxu0 0.0
        %1247 = vmatpush1.msra.mxu0 0.0
        %1248 = vmatprep.subr.mxu0 0.0
        %1249 = vmatpush1.msra.mxu0 0.0
        %1250 = vmatprep.subr.mxu0 0.0
        %1251 = vmatpush1.msra.mxu0 0.0
        %1252 = vmatprep.subr.mxu0 0.0
        %1253 = vmatpush1.msra.mxu0 0.0
        %1254 = vmatprep.subr.mxu0 0.0
        %1255 = vmatpush1.msra.mxu0 0.0
        %1256 = vmatprep.subr.mxu0 0.0
        %1257 = vmatpush1.msra.mxu0 0.0
        %1258 = vmatprep.subr.mxu0 0.0
        %1259 = vmatpush1.msra.mxu0 0.0
        %1260 = vmatprep.subr.mxu0 0.0
        %1261 = vmatpush1.msra.mxu0 0.0
        %1262 = vmatprep.subr.mxu0 0.0
        %1263 = vmatpush1.msra.mxu0 0.0
        %1264 = vmatprep.subr.mxu0 0.0
        %1265 = vmatpush1.msra.mxu0 0.0
        %1266 = vmatprep.subr.mxu0 0.0
        %1267 = vmatpush1.msra.mxu0 0.0
        %1268 = vmatprep.subr.mxu0 0.0
        %1269 = vmatpush1.msra.mxu0 0.0
        %1270 = vmatprep.subr.mxu0 0.0
        %1271 = vmatpush1.msra.mxu0 0.0
        %1272 = vmatprep.subr.mxu0 0.0
        %1273 = vmatpush1.msra.mxu0 0.0
        %1274 = vmatprep.subr.mxu0 0.0
        %1275 = vmatpush1.msra.mxu0 0.0
        %1276 = vmatprep.subr.mxu0 0.0
        %1277 = vmatpush1.msra.mxu0 0.0
        %1278 = vmatprep.subr.mxu0 0.0
        %1279 = vmatpush1.msra.mxu0 0.0
        %1280 = vmatprep.subr.mxu0 0.0
        %1281 = vmatpush1.msra.mxu0 0.0
        %1282 = vmatprep.subr.mxu0 0.0
        %1283 = vmatpush1.msra.mxu0 0.0
        %1284 = vmatprep.subr.mxu0 0.0
        %1285 = vmatpush1.msra.mxu0 0.0
        %1286 = vmatprep.subr.mxu0 0.0
        %1287 = vmatpush1.msra.mxu0 0.0
        %1288 = vmatprep.subr.mxu0 0.0
        %1289 = vmatpush1.msra.mxu0 0.0
        %1290 = vmatprep.subr.mxu0 0.0
        %1291 = vmatpush1.msra.mxu0 0.0
        %1292 = vmatprep.subr.mxu0 0.0
        %1293 = vmatpush1.msra.mxu0 0.0
        %1294 = vmatprep.subr.mxu0 0.0
        %1295 = vmatpush1.msra.mxu0 0.0
        %1296 = vmatprep.mubr.f32.mxu0 0.0
        %1297 = vmatmul.mubr.f32.gmra.mrb[0].mxu0 %v1230
        %v1298 = vpop.f32.mrb[0].mxu0
        %v1299 = vadd.f32 0.0, %v1298
        %v1300 = vpop.f32.mrb[0].mxu0
        %1301 = vdwg.mxu0
        %v1302 = vmax.f32 %v1225, %v1299
        %v1303 = vld [vmem:[#allocation10] sm:$0xff]
        %v1304 = vld [vmem:[#allocation10 + $0x8] sm:$0xff]
        %v1305 = vld [vmem:[#allocation10 + $0x10] sm:$0xff]
        %v1306 = vld [vmem:[#allocation10 + $0x18] sm:$0xff]
        %v1307 = vld [vmem:[#allocation10 + $0x20] sm:$0xff]
        %v1308 = vld [vmem:[#allocation10 + $0x28] sm:$0xff]
        %v1309 = vld [vmem:[#allocation10 + $0x30] sm:$0xff]
        %v1310 = vld [vmem:[#allocation10 + $0x38] sm:$0xff]
        %v1311 = vld [vmem:[#allocation10 + $0x40] sm:$0xff]
        %v1312 = vld [vmem:[#allocation10 + $0x48] sm:$0xff]
        %v1313 = vld [vmem:[#allocation10 + $0x50] sm:$0xff]
        %v1314 = vld [vmem:[#allocation10 + $0x58] sm:$0xff]
        %v1316 = vsel %vm1145, %v1302, 0
        %1318 = vmatprep.subr.mxu0 0.0
        %1319 = vmatpush1.msra.mxu0 %v1303
        %1320 = vmatprep.subr.mxu0 0.0
        %1321 = vmatpush1.msra.mxu0 %v1304
        %1322 = vmatprep.subr.mxu0 0.0
        %1323 = vmatpush1.msra.mxu0 %v1305
        %1324 = vmatprep.subr.mxu0 0.0
        %1325 = vmatpush1.msra.mxu0 %v1306
        %1326 = vmatprep.subr.mxu0 0.0
        %1327 = vmatpush1.msra.mxu0 %v1307
        %1328 = vmatprep.subr.mxu0 0.0
        %1329 = vmatpush1.msra.mxu0 %v1308
        %1330 = vmatprep.subr.mxu0 0.0
        %1331 = vmatpush1.msra.mxu0 %v1309
        %1332 = vmatprep.subr.mxu0 0.0
        %1333 = vmatpush1.msra.mxu0 %v1310
        %1334 = vmatprep.subr.mxu0 0.0
        %1335 = vmatpush1.msra.mxu0 %v1311
        %1336 = vmatprep.subr.mxu0 0.0
        %1337 = vmatpush1.msra.mxu0 %v1312
        %1338 = vmatprep.subr.mxu0 0.0
        %1339 = vmatpush1.msra.mxu0 %v1313
        %1340 = vmatprep.subr.mxu0 0.0
        %1341 = vmatpush1.msra.mxu0 %v1314
        %1342 = vmatprep.subr.mxu0 0.0
        %1343 = vmatpush1.msra.mxu0 0.0
        %1344 = vmatprep.subr.mxu0 0.0
        %1345 = vmatpush1.msra.mxu0 0.0
        %1346 = vmatprep.subr.mxu0 0.0
        %1347 = vmatpush1.msra.mxu0 0.0
        %1348 = vmatprep.subr.mxu0 0.0
        %1349 = vmatpush1.msra.mxu0 0.0
        %1350 = vmatprep.subr.mxu0 0.0
        %1351 = vmatpush1.msra.mxu0 0.0
        %1352 = vmatprep.subr.mxu0 0.0
        %1353 = vmatpush1.msra.mxu0 0.0
        %1354 = vmatprep.subr.mxu0 0.0
        %1355 = vmatpush1.msra.mxu0 0.0
        %1356 = vmatprep.subr.mxu0 0.0
        %1357 = vmatpush1.msra.mxu0 0.0
        %1358 = vmatprep.subr.mxu0 0.0
        %1359 = vmatpush1.msra.mxu0 0.0
        %1360 = vmatprep.subr.mxu0 0.0
        %1361 = vmatpush1.msra.mxu0 0.0
        %1362 = vmatprep.subr.mxu0 0.0
        %1363 = vmatpush1.msra.mxu0 0.0
        %1364 = vmatprep.subr.mxu0 0.0
        %1365 = vmatpush1.msra.mxu0 0.0
        %1366 = vmatprep.subr.mxu0 0.0
        %1367 = vmatpush1.msra.mxu0 0.0
        %1368 = vmatprep.subr.mxu0 0.0
        %1369 = vmatpush1.msra.mxu0 0.0
        %1370 = vmatprep.subr.mxu0 0.0
        %1371 = vmatpush1.msra.mxu0 0.0
        %1372 = vmatprep.subr.mxu0 0.0
        %1373 = vmatpush1.msra.mxu0 0.0
        %1374 = vmatprep.subr.mxu0 0.0
        %1375 = vmatpush1.msra.mxu0 0.0
        %1376 = vmatprep.subr.mxu0 0.0
        %1377 = vmatpush1.msra.mxu0 0.0
        %1378 = vmatprep.subr.mxu0 0.0
        %1379 = vmatpush1.msra.mxu0 0.0
        %1380 = vmatprep.subr.mxu0 0.0
        %1381 = vmatpush1.msra.mxu0 0.0
        %1382 = vmatprep.mubr.f32.mxu0 0.0
        %1383 = vmatmul.mubr.f32.gmra.mrb[0].mxu0 %v1316
        %v1384 = vpop.f32.mrb[0].mxu0
        %v1385 = vadd.f32 0.0, %v1384
        %v1386 = vpop.f32.mrb[0].mxu0
        %1387 = vdwg.mxu0
        %v1388 = vld [vmem:[#allocation12] sm:$0xff]
        %v1389 = vld [vmem:[#allocation12 + $0x8] sm:$0xff]
        %v1390 = vld [vmem:[#allocation12 + $0x10] sm:$0xff]
        %v1391 = vld [vmem:[#allocation12 + $0x18] sm:$0xff]
        %v1392 = vld [vmem:[#allocation12 + $0x20] sm:$0xff]
        %v1393 = vld [vmem:[#allocation12 + $0x28] sm:$0xff]
        %v1394 = vld [vmem:[#allocation12 + $0x30] sm:$0xff]
        %v1395 = vld [vmem:[#allocation12 + $0x38] sm:$0xff]
        %v1396 = vld [vmem:[#allocation12 + $0x40] sm:$0xff]
        %v1397 = vld [vmem:[#allocation12 + $0x48] sm:$0xff]
        %v1398 = vld [vmem:[#allocation12 + $0x50] sm:$0xff]
        %v1399 = vld [vmem:[#allocation12 + $0x58] sm:$0xff]
        %1400 = vmatprep.subr.mxu0 0.0
        %1401 = vmatpush1.msra.mxu0 %v1388
        %1402 = vmatprep.subr.mxu0 0.0
        %1403 = vmatpush1.msra.mxu0 %v1389
        %1404 = vmatprep.subr.mxu0 0.0
        %1405 = vmatpush1.msra.mxu0 %v1390
        %1406 = vmatprep.subr.mxu0 0.0
        %1407 = vmatpush1.msra.mxu0 %v1391
        %1408 = vmatprep.subr.mxu0 0.0
        %1409 = vmatpush1.msra.mxu0 %v1392
        %1410 = vmatprep.subr.mxu0 0.0
        %1411 = vmatpush1.msra.mxu0 %v1393
        %1412 = vmatprep.subr.mxu0 0.0
        %1413 = vmatpush1.msra.mxu0 %v1394
        %1414 = vmatprep.subr.mxu0 0.0
        %1415 = vmatpush1.msra.mxu0 %v1395
        %1416 = vmatprep.subr.mxu0 0.0
        %1417 = vmatpush1.msra.mxu0 %v1396
        %1418 = vmatprep.subr.mxu0 0.0
        %1419 = vmatpush1.msra.mxu0 %v1397
        %1420 = vmatprep.subr.mxu0 0.0
        %1421 = vmatpush1.msra.mxu0 %v1398
        %1422 = vmatprep.subr.mxu0 0.0
        %1423 = vmatpush1.msra.mxu0 %v1399
        %1424 = vmatprep.subr.mxu0 0.0
        %1425 = vmatpush1.msra.mxu0 0.0
        %1426 = vmatprep.subr.mxu0 0.0
        %1427 = vmatpush1.msra.mxu0 0.0
        %1428 = vmatprep.subr.mxu0 0.0
        %1429 = vmatpush1.msra.mxu0 0.0
        %1430 = vmatprep.subr.mxu0 0.0
        %1431 = vmatpush1.msra.mxu0 0.0
        %1432 = vmatprep.subr.mxu0 0.0
        %1433 = vmatpush1.msra.mxu0 0.0
        %1434 = vmatprep.subr.mxu0 0.0
        %1435 = vmatpush1.msra.mxu0 0.0
        %1436 = vmatprep.subr.mxu0 0.0
        %1437 = vmatpush1.msra.mxu0 0.0
        %1438 = vmatprep.subr.mxu0 0.0
        %1439 = vmatpush1.msra.mxu0 0.0
        %1440 = vmatprep.subr.mxu0 0.0
        %1441 = vmatpush1.msra.mxu0 0.0
        %1442 = vmatprep.subr.mxu0 0.0
        %1443 = vmatpush1.msra.mxu0 0.0
        %1444 = vmatprep.subr.mxu0 0.0
        %1445 = vmatpush1.msra.mxu0 0.0
        %1446 = vmatprep.subr.mxu0 0.0
        %1447 = vmatpush1.msra.mxu0 0.0
        %1448 = vmatprep.subr.mxu0 0.0
        %1449 = vmatpush1.msra.mxu0 0.0
        %1450 = vmatprep.subr.mxu0 0.0
        %1451 = vmatpush1.msra.mxu0 0.0
        %1452 = vmatprep.subr.mxu0 0.0
        %1453 = vmatpush1.msra.mxu0 0.0
        %1454 = vmatprep.subr.mxu0 0.0
        %1455 = vmatpush1.msra.mxu0 0.0
        %1456 = vmatprep.subr.mxu0 0.0
        %1457 = vmatpush1.msra.mxu0 0.0
        %1458 = vmatprep.subr.mxu0 0.0
        %1459 = vmatpush1.msra.mxu0 0.0
        %1460 = vmatprep.subr.mxu0 0.0
        %1461 = vmatpush1.msra.mxu0 0.0
        %1462 = vmatprep.subr.mxu0 0.0
        %1463 = vmatpush1.msra.mxu0 0.0
        %1464 = vmatprep.mubr.f32.mxu0 0.0
        %1465 = vmatmul.mubr.f32.gmra.mrb[0].mxu0 %v1316
        %v1466 = vpop.f32.mrb[0].mxu0
        %v1467 = vadd.f32 0.0, %v1466
        %v1468 = vpop.f32.mrb[0].mxu0
        %1469 = vdwg.mxu0
        %v1470 = vmax.f32 %v1385, %v1467
        %vm1471 = vcmask 390144
        %1472 = vst.msk [vmem:[#allocation4] sm:$0x3f] %vm1471, %v1470
        %v1473 = vld [vmem:[#allocation4] sm:$0xf]
        %v1474 = vld [vmem:[#allocation7] sm:$0xff]
        %v1475 = vld [vmem:[#allocation7 + $0x8] sm:$0xff]
        %v1476 = vld [vmem:[#allocation7 + $0x10] sm:$0xff]
        %v1477 = vld [vmem:[#allocation7 + $0x18] sm:$0xff]
        %v1478 = vld [vmem:[#allocation7 + $0x20] sm:$0xff]
        %v1479 = vld [vmem:[#allocation7 + $0x28] sm:$0xff]
        %v1480 = vld [vmem:[#allocation4 + $0x1] sm:$0xf]
        %s1481 = scalar_lea.vmem [#allocation7], 48
        %v1482 = vld [vmem:[%s1481] sm:$0xff]
        %v1483 = vld [vmem:[%s1481 + $0x8] sm:$0xff]
        %v1484 = vld [vmem:[%s1481 + $0x10] sm:$0xff]
        %v1485 = vld [vmem:[%s1481 + $0x18] sm:$0xff]
        %v1486 = vld [vmem:[%s1481 + $0x20] sm:$0xff]
        %v1487 = vld [vmem:[%s1481 + $0x28] sm:$0xff]
        %v1489 = vsel %vm569, %v1480, 0
        %1491 = vmatprep.subr.mxu0 0.0
        %1492 = vmatpush1.msra.mxu0 %v1482
        %1493 = vmatprep.subr.mxu0 0.0
        %1494 = vmatpush1.msra.mxu0 %v1483
        %1495 = vmatprep.subr.mxu0 0.0
        %1496 = vmatpush1.msra.mxu0 %v1484
        %1497 = vmatprep.subr.mxu0 0.0
        %1498 = vmatpush1.msra.mxu0 %v1485
        %1499 = vmatprep.subr.mxu0 0.0
        %1500 = vmatpush1.msra.mxu0 %v1486
        %1501 = vmatprep.subr.mxu0 0.0
        %1502 = vmatpush1.msra.mxu0 %v1487
        %1503 = vmatprep.subr.mxu0 0.0
        %1504 = vmatpush1.msra.mxu0 0.0
        %1505 = vmatprep.subr.mxu0 0.0
        %1506 = vmatpush1.msra.mxu0 0.0
        %1507 = vmatprep.subr.mxu0 0.0
        %1508 = vmatpush1.msra.mxu0 0.0
        %1509 = vmatprep.subr.mxu0 0.0
        %1510 = vmatpush1.msra.mxu0 0.0
        %1511 = vmatprep.subr.mxu0 0.0
        %1512 = vmatpush1.msra.mxu0 0.0
        %1513 = vmatprep.subr.mxu0 0.0
        %1514 = vmatpush1.msra.mxu0 0.0
        %1515 = vmatprep.subr.mxu0 0.0
        %1516 = vmatpush1.msra.mxu0 0.0
        %1517 = vmatprep.subr.mxu0 0.0
        %1518 = vmatpush1.msra.mxu0 0.0
        %1519 = vmatprep.subr.mxu0 0.0
        %1520 = vmatpush1.msra.mxu0 0.0
        %1521 = vmatprep.subr.mxu0 0.0
        %1522 = vmatpush1.msra.mxu0 0.0
        %1523 = vmatprep.subr.mxu0 0.0
        %1524 = vmatpush1.msra.mxu0 0.0
        %1525 = vmatprep.subr.mxu0 0.0
        %1526 = vmatpush1.msra.mxu0 0.0
        %1527 = vmatprep.subr.mxu0 0.0
        %1528 = vmatpush1.msra.mxu0 0.0
        %1529 = vmatprep.subr.mxu0 0.0
        %1530 = vmatpush1.msra.mxu0 0.0
        %1531 = vmatprep.subr.mxu0 0.0
        %1532 = vmatpush1.msra.mxu0 0.0
        %1533 = vmatprep.subr.mxu0 0.0
        %1534 = vmatpush1.msra.mxu0 0.0
        %1535 = vmatprep.subr.mxu0 0.0
        %1536 = vmatpush1.msra.mxu0 0.0
        %1537 = vmatprep.subr.mxu0 0.0
        %1538 = vmatpush1.msra.mxu0 0.0
        %1539 = vmatprep.subr.mxu0 0.0
        %1540 = vmatpush1.msra.mxu0 0.0
        %1541 = vmatprep.subr.mxu0 0.0
        %1542 = vmatpush1.msra.mxu0 0.0
        %1543 = vmatprep.subr.mxu0 0.0
        %1544 = vmatpush1.msra.mxu0 0.0
        %1545 = vmatprep.subr.mxu0 0.0
        %1546 = vmatpush1.msra.mxu0 0.0
        %1547 = vmatprep.subr.mxu0 0.0
        %1548 = vmatpush1.msra.mxu0 0.0
        %1549 = vmatprep.subr.mxu0 0.0
        %1550 = vmatpush1.msra.mxu0 0.0
        %1551 = vmatprep.subr.mxu0 0.0
        %1552 = vmatpush1.msra.mxu0 0.0
        %1553 = vmatprep.subr.mxu0 0.0
        %1554 = vmatpush1.msra.mxu0 0.0
        %1555 = vmatprep.mubr.f32.mxu0 0.0
        %1556 = vmatmul.mubr.f32.gmra.mrb[0].mxu0 %v1489
        %v1557 = vpop.f32.mrb[0].mxu0
        %v1558 = vadd.f32 0.0, %v1557
        %v1559 = vpop.f32.mrb[0].mxu0
        %1560 = vdwg.mxu0
        %v1562 = vsel %vm569, %v1473, 0
        %1564 = vmatprep.subr.mxu0 0.0
        %1565 = vmatpush1.msra.mxu0 %v1474
        %1566 = vmatprep.subr.mxu0 0.0
        %1567 = vmatpush1.msra.mxu0 %v1475
        %1568 = vmatprep.subr.mxu0 0.0
        %1569 = vmatpush1.msra.mxu0 %v1476
        %1570 = vmatprep.subr.mxu0 0.0
        %1571 = vmatpush1.msra.mxu0 %v1477
        %1572 = vmatprep.subr.mxu0 0.0
        %1573 = vmatpush1.msra.mxu0 %v1478
        %1574 = vmatprep.subr.mxu0 0.0
        %1575 = vmatpush1.msra.mxu0 %v1479
        %1576 = vmatprep.subr.mxu0 0.0
        %1577 = vmatpush1.msra.mxu0 0.0
        %1578 = vmatprep.subr.mxu0 0.0
        %1579 = vmatpush1.msra.mxu0 0.0
        %1580 = vmatprep.subr.mxu0 0.0
        %1581 = vmatpush1.msra.mxu0 0.0
        %1582 = vmatprep.subr.mxu0 0.0
        %1583 = vmatpush1.msra.mxu0 0.0
        %1584 = vmatprep.subr.mxu0 0.0
        %1585 = vmatpush1.msra.mxu0 0.0
        %1586 = vmatprep.subr.mxu0 0.0
        %1587 = vmatpush1.msra.mxu0 0.0
        %1588 = vmatprep.subr.mxu0 0.0
        %1589 = vmatpush1.msra.mxu0 0.0
        %1590 = vmatprep.subr.mxu0 0.0
        %1591 = vmatpush1.msra.mxu0 0.0
        %1592 = vmatprep.subr.mxu0 0.0
        %1593 = vmatpush1.msra.mxu0 0.0
        %1594 = vmatprep.subr.mxu0 0.0
        %1595 = vmatpush1.msra.mxu0 0.0
        %1596 = vmatprep.subr.mxu0 0.0
        %1597 = vmatpush1.msra.mxu0 0.0
        %1598 = vmatprep.subr.mxu0 0.0
        %1599 = vmatpush1.msra.mxu0 0.0
        %1600 = vmatprep.subr.mxu0 0.0
        %1601 = vmatpush1.msra.mxu0 0.0
        %1602 = vmatprep.subr.mxu0 0.0
        %1603 = vmatpush1.msra.mxu0 0.0
        %1604 = vmatprep.subr.mxu0 0.0
        %1605 = vmatpush1.msra.mxu0 0.0
        %1606 = vmatprep.subr.mxu0 0.0
        %1607 = vmatpush1.msra.mxu0 0.0
        %1608 = vmatprep.subr.mxu0 0.0
        %1609 = vmatpush1.msra.mxu0 0.0
        %1610 = vmatprep.subr.mxu0 0.0
        %1611 = vmatpush1.msra.mxu0 0.0
        %1612 = vmatprep.subr.mxu0 0.0
        %1613 = vmatpush1.msra.mxu0 0.0
        %1614 = vmatprep.subr.mxu0 0.0
        %1615 = vmatpush1.msra.mxu0 0.0
        %1616 = vmatprep.subr.mxu0 0.0
        %1617 = vmatpush1.msra.mxu0 0.0
        %1618 = vmatprep.subr.mxu0 0.0
        %1619 = vmatpush1.msra.mxu0 0.0
        %1620 = vmatprep.subr.mxu0 0.0
        %1621 = vmatpush1.msra.mxu0 0.0
        %1622 = vmatprep.subr.mxu0 0.0
        %1623 = vmatpush1.msra.mxu0 0.0
        %1624 = vmatprep.subr.mxu0 0.0
        %1625 = vmatpush1.msra.mxu0 0.0
        %1626 = vmatprep.subr.mxu0 0.0
        %1627 = vmatpush1.msra.mxu0 0.0
        %1628 = vmatprep.mubr.f32.mxu0 0.0
        %1629 = vmatmul.mubr.f32.gmra.mrb[0].mxu0 %v1562
        %v1630 = vpop.f32.mrb[0].mxu0
        %v1631 = vadd.f32 %v1558, %v1630
        %v1632 = vpop.f32.mrb[0].mxu0
        %1633 = vdwg.mxu0
        %v1634 = vld [vmem:[#allocation4 + $0x2] sm:$0xf]
        %s1635 = scalar_lea.vmem [#allocation7], 96
        %v1636 = vld [vmem:[%s1635] sm:$0xff]
        %v1637 = vld [vmem:[%s1635 + $0x8] sm:$0xff]
        %v1638 = vld [vmem:[%s1635 + $0x10] sm:$0xff]
        %v1639 = vld [vmem:[%s1635 + $0x18] sm:$0xff]
        %v1640 = vld [vmem:[%s1635 + $0x20] sm:$0xff]
        %v1641 = vld [vmem:[%s1635 + $0x28] sm:$0xff]
        %v1643 = vsel %vm569, %v1634, 0
        %1645 = vmatprep.subr.mxu0 0.0
        %1646 = vmatpush1.msra.mxu0 %v1636
        %1647 = vmatprep.subr.mxu0 0.0
        %1648 = vmatpush1.msra.mxu0 %v1637
        %1649 = vmatprep.subr.mxu0 0.0
        %1650 = vmatpush1.msra.mxu0 %v1638
        %1651 = vmatprep.subr.mxu0 0.0
        %1652 = vmatpush1.msra.mxu0 %v1639
        %1653 = vmatprep.subr.mxu0 0.0
        %1654 = vmatpush1.msra.mxu0 %v1640
        %1655 = vmatprep.subr.mxu0 0.0
        %1656 = vmatpush1.msra.mxu0 %v1641
        %1657 = vmatprep.subr.mxu0 0.0
        %1658 = vmatpush1.msra.mxu0 0.0
        %1659 = vmatprep.subr.mxu0 0.0
        %1660 = vmatpush1.msra.mxu0 0.0
        %1661 = vmatprep.subr.mxu0 0.0
        %1662 = vmatpush1.msra.mxu0 0.0
        %1663 = vmatprep.subr.mxu0 0.0
        %1664 = vmatpush1.msra.mxu0 0.0
        %1665 = vmatprep.subr.mxu0 0.0
        %1666 = vmatpush1.msra.mxu0 0.0
        %1667 = vmatprep.subr.mxu0 0.0
        %1668 = vmatpush1.msra.mxu0 0.0
        %1669 = vmatprep.subr.mxu0 0.0
        %1670 = vmatpush1.msra.mxu0 0.0
        %1671 = vmatprep.subr.mxu0 0.0
        %1672 = vmatpush1.msra.mxu0 0.0
        %1673 = vmatprep.subr.mxu0 0.0
        %1674 = vmatpush1.msra.mxu0 0.0
        %1675 = vmatprep.subr.mxu0 0.0
        %1676 = vmatpush1.msra.mxu0 0.0
        %1677 = vmatprep.subr.mxu0 0.0
        %1678 = vmatpush1.msra.mxu0 0.0
        %1679 = vmatprep.subr.mxu0 0.0
        %1680 = vmatpush1.msra.mxu0 0.0
        %1681 = vmatprep.subr.mxu0 0.0
        %1682 = vmatpush1.msra.mxu0 0.0
        %1683 = vmatprep.subr.mxu0 0.0
        %1684 = vmatpush1.msra.mxu0 0.0
        %1685 = vmatprep.subr.mxu0 0.0
        %1686 = vmatpush1.msra.mxu0 0.0
        %1687 = vmatprep.subr.mxu0 0.0
        %1688 = vmatpush1.msra.mxu0 0.0
        %1689 = vmatprep.subr.mxu0 0.0
        %1690 = vmatpush1.msra.mxu0 0.0
        %1691 = vmatprep.subr.mxu0 0.0
        %1692 = vmatpush1.msra.mxu0 0.0
        %1693 = vmatprep.subr.mxu0 0.0
        %1694 = vmatpush1.msra.mxu0 0.0
        %1695 = vmatprep.subr.mxu0 0.0
        %1696 = vmatpush1.msra.mxu0 0.0
        %1697 = vmatprep.subr.mxu0 0.0
        %1698 = vmatpush1.msra.mxu0 0.0
        %1699 = vmatprep.subr.mxu0 0.0
        %1700 = vmatpush1.msra.mxu0 0.0
        %1701 = vmatprep.subr.mxu0 0.0
        %1702 = vmatpush1.msra.mxu0 0.0
        %1703 = vmatprep.subr.mxu0 0.0
        %1704 = vmatpush1.msra.mxu0 0.0
        %1705 = vmatprep.subr.mxu0 0.0
        %1706 = vmatpush1.msra.mxu0 0.0
        %1707 = vmatprep.subr.mxu0 0.0
        %1708 = vmatpush1.msra.mxu0 0.0
        %1709 = vmatprep.mubr.f32.mxu0 0.0
        %1710 = vmatmul.mubr.f32.gmra.mrb[0].mxu0 %v1643
        %v1711 = vpop.f32.mrb[0].mxu0
        %v1712 = vadd.f32 0.0, %v1711
        %v1713 = vpop.f32.mrb[0].mxu0
        %1714 = vdwg.mxu0
        %v1715 = vadd.f32 %v1631, %v1712
        %v1716 = vld [vmem:[%s6] sm:$0x1]
        %v1718 = vlaneseq
        %v1719 = vshrl.u32 %v1718, 7
        %v1720 = vsub.s32 0, %v1719
        %v1721 = vrot.slane %v1716, %v1720
        %v1723 = vadd.f32 %v1715, %v1721
        %v1724 = vmax.f32 %v1723, 0.0
        %vm1725 = vcmask 519168
        %1726 = vst.msk [vmem:[#allocation3] sm:$0xf] %vm1725, %v1724
        %v1727 = vld [vmem:[#allocation3] sm:$0x3]
        %v1728 = vld [vmem:[#allocation9] sm:$0xff]
        %v1729 = vld [vmem:[#allocation9 + $0x8] sm:$0xff]
        %v1730 = vld [vmem:[#allocation9 + $0x10] sm:$0xff]
        %v1731 = vld [vmem:[#allocation9 + $0x18] sm:$0xff]
        %v1732 = vld [vmem:[#allocation9 + $0x20] sm:$0xff]
        %v1733 = vld [vmem:[#allocation9 + $0x28] sm:$0xff]
        %v1734 = vld [vmem:[#allocation9 + $0x30] sm:$0xff]
        %v1735 = vld [vmem:[#allocation9 + $0x38] sm:$0xff]
        %v1736 = vld [vmem:[#allocation3 + $0x1] sm:$0x3]
        %s1737 = scalar_lea.vmem [#allocation9], 64
        %v1738 = vld [vmem:[%s1737] sm:$0xff]
        %v1739 = vld [vmem:[%s1737 + $0x8] sm:$0xff]
        %v1740 = vld [vmem:[%s1737 + $0x10] sm:$0xff]
        %v1741 = vld [vmem:[%s1737 + $0x18] sm:$0xff]
        %v1742 = vld [vmem:[%s1737 + $0x20] sm:$0xff]
        %v1743 = vld [vmem:[%s1737 + $0x28] sm:$0xff]
        %v1744 = vld [vmem:[%s1737 + $0x30] sm:$0xff]
        %v1745 = vld [vmem:[%s1737 + $0x38] sm:$0xff]
        %vm1746 = vcmask 523264
        %v1748 = vsel %vm1746, %v1736, 0
        %1750 = vmatprep.subr.mxu0 0.0
        %1751 = vmatpush1.msra.mxu0 %v1738
        %1752 = vmatprep.subr.mxu0 0.0
        %1753 = vmatpush1.msra.mxu0 %v1739
        %1754 = vmatprep.subr.mxu0 0.0
        %1755 = vmatpush1.msra.mxu0 %v1740
        %1756 = vmatprep.subr.mxu0 0.0
        %1757 = vmatpush1.msra.mxu0 %v1741
        %1758 = vmatprep.subr.mxu0 0.0
        %1759 = vmatpush1.msra.mxu0 %v1742
        %1760 = vmatprep.subr.mxu0 0.0
        %1761 = vmatpush1.msra.mxu0 %v1743
        %1762 = vmatprep.subr.mxu0 0.0
        %1763 = vmatpush1.msra.mxu0 %v1744
        %1764 = vmatprep.subr.mxu0 0.0
        %1765 = vmatpush1.msra.mxu0 %v1745
        %1766 = vmatprep.subr.mxu0 0.0
        %1767 = vmatpush1.msra.mxu0 0.0
        %1768 = vmatprep.subr.mxu0 0.0
        %1769 = vmatpush1.msra.mxu0 0.0
        %1770 = vmatprep.subr.mxu0 0.0
        %1771 = vmatpush1.msra.mxu0 0.0
        %1772 = vmatprep.subr.mxu0 0.0
        %1773 = vmatpush1.msra.mxu0 0.0
        %1774 = vmatprep.subr.mxu0 0.0
        %1775 = vmatpush1.msra.mxu0 0.0
        %1776 = vmatprep.subr.mxu0 0.0
        %1777 = vmatpush1.msra.mxu0 0.0
        %1778 = vmatprep.subr.mxu0 0.0
        %1779 = vmatpush1.msra.mxu0 0.0
        %1780 = vmatprep.subr.mxu0 0.0
        %1781 = vmatpush1.msra.mxu0 0.0
        %1782 = vmatprep.subr.mxu0 0.0
        %1783 = vmatpush1.msra.mxu0 0.0
        %1784 = vmatprep.subr.mxu0 0.0
        %1785 = vmatpush1.msra.mxu0 0.0
        %1786 = vmatprep.subr.mxu0 0.0
        %1787 = vmatpush1.msra.mxu0 0.0
        %1788 = vmatprep.subr.mxu0 0.0
        %1789 = vmatpush1.msra.mxu0 0.0
        %1790 = vmatprep.subr.mxu0 0.0
        %1791 = vmatpush1.msra.mxu0 0.0
        %1792 = vmatprep.subr.mxu0 0.0
        %1793 = vmatpush1.msra.mxu0 0.0
        %1794 = vmatprep.subr.mxu0 0.0
        %1795 = vmatpush1.msra.mxu0 0.0
        %1796 = vmatprep.subr.mxu0 0.0
        %1797 = vmatpush1.msra.mxu0 0.0
        %1798 = vmatprep.subr.mxu0 0.0
        %1799 = vmatpush1.msra.mxu0 0.0
        %1800 = vmatprep.subr.mxu0 0.0
        %1801 = vmatpush1.msra.mxu0 0.0
        %1802 = vmatprep.subr.mxu0 0.0
        %1803 = vmatpush1.msra.mxu0 0.0
        %1804 = vmatprep.subr.mxu0 0.0
        %1805 = vmatpush1.msra.mxu0 0.0
        %1806 = vmatprep.subr.mxu0 0.0
        %1807 = vmatpush1.msra.mxu0 0.0
        %1808 = vmatprep.subr.mxu0 0.0
        %1809 = vmatpush1.msra.mxu0 0.0
        %1810 = vmatprep.subr.mxu0 0.0
        %1811 = vmatpush1.msra.mxu0 0.0
        %1812 = vmatprep.subr.mxu0 0.0
        %1813 = vmatpush1.msra.mxu0 0.0
        %1814 = vmatprep.mubr.f32.mxu0 0.0
        %1815 = vmatmul.mubr.f32.gmra.mrb[0].mxu0 %v1748
        %v1816 = vpop.f32.mrb[0].mxu0
        %v1817 = vadd.f32 0.0, %v1816
        %v1818 = vpop.f32.mrb[0].mxu0
        %1819 = vdwg.mxu0
        %v1821 = vsel %vm1746, %v1727, 0
        %1823 = vmatprep.subr.mxu0 0.0
        %1824 = vmatpush1.msra.mxu0 %v1728
        %1825 = vmatprep.subr.mxu0 0.0
        %1826 = vmatpush1.msra.mxu0 %v1729
        %1827 = vmatprep.subr.mxu0 0.0
        %1828 = vmatpush1.msra.mxu0 %v1730
        %1829 = vmatprep.subr.mxu0 0.0
        %1830 = vmatpush1.msra.mxu0 %v1731
        %1831 = vmatprep.subr.mxu0 0.0
        %1832 = vmatpush1.msra.mxu0 %v1732
        %1833 = vmatprep.subr.mxu0 0.0
        %1834 = vmatpush1.msra.mxu0 %v1733
        %1835 = vmatprep.subr.mxu0 0.0
        %1836 = vmatpush1.msra.mxu0 %v1734
        %1837 = vmatprep.subr.mxu0 0.0
        %1838 = vmatpush1.msra.mxu0 %v1735
        %1839 = vmatprep.subr.mxu0 0.0
        %1840 = vmatpush1.msra.mxu0 0.0
        %1841 = vmatprep.subr.mxu0 0.0
        %1842 = vmatpush1.msra.mxu0 0.0
        %1843 = vmatprep.subr.mxu0 0.0
        %1844 = vmatpush1.msra.mxu0 0.0
        %1845 = vmatprep.subr.mxu0 0.0
        %1846 = vmatpush1.msra.mxu0 0.0
        %1847 = vmatprep.subr.mxu0 0.0
        %1848 = vmatpush1.msra.mxu0 0.0
        %1849 = vmatprep.subr.mxu0 0.0
        %1850 = vmatpush1.msra.mxu0 0.0
        %1851 = vmatprep.subr.mxu0 0.0
        %1852 = vmatpush1.msra.mxu0 0.0
        %1853 = vmatprep.subr.mxu0 0.0
        %1854 = vmatpush1.msra.mxu0 0.0
        %1855 = vmatprep.subr.mxu0 0.0
        %1856 = vmatpush1.msra.mxu0 0.0
        %1857 = vmatprep.subr.mxu0 0.0
        %1858 = vmatpush1.msra.mxu0 0.0
        %1859 = vmatprep.subr.mxu0 0.0
        %1860 = vmatpush1.msra.mxu0 0.0
        %1861 = vmatprep.subr.mxu0 0.0
        %1862 = vmatpush1.msra.mxu0 0.0
        %1863 = vmatprep.subr.mxu0 0.0
        %1864 = vmatpush1.msra.mxu0 0.0
        %1865 = vmatprep.subr.mxu0 0.0
        %1866 = vmatpush1.msra.mxu0 0.0
        %1867 = vmatprep.subr.mxu0 0.0
        %1868 = vmatpush1.msra.mxu0 0.0
        %1869 = vmatprep.subr.mxu0 0.0
        %1870 = vmatpush1.msra.mxu0 0.0
        %1871 = vmatprep.subr.mxu0 0.0
        %1872 = vmatpush1.msra.mxu0 0.0
        %1873 = vmatprep.subr.mxu0 0.0
        %1874 = vmatpush1.msra.mxu0 0.0
        %1875 = vmatprep.subr.mxu0 0.0
        %1876 = vmatpush1.msra.mxu0 0.0
        %1877 = vmatprep.subr.mxu0 0.0
        %1878 = vmatpush1.msra.mxu0 0.0
        %1879 = vmatprep.subr.mxu0 0.0
        %1880 = vmatpush1.msra.mxu0 0.0
        %1881 = vmatprep.subr.mxu0 0.0
        %1882 = vmatpush1.msra.mxu0 0.0
        %1883 = vmatprep.subr.mxu0 0.0
        %1884 = vmatpush1.msra.mxu0 0.0
        %1885 = vmatprep.subr.mxu0 0.0
        %1886 = vmatpush1.msra.mxu0 0.0
        %1887 = vmatprep.mubr.f32.mxu0 0.0
        %1888 = vmatmul.mubr.f32.gmra.mrb[0].mxu0 %v1821
        %v1889 = vpop.f32.mrb[0].mxu0
        %v1890 = vadd.f32 %v1817, %v1889
        %v1891 = vpop.f32.mrb[0].mxu0
        %1892 = vdwg.mxu0
        %v1893 = vld [vmem:[#allocation3 + $0x2] sm:$0x3]
        %s1894 = scalar_lea.vmem [#allocation9], 128
        %v1895 = vld [vmem:[%s1894] sm:$0xff]
        %v1896 = vld [vmem:[%s1894 + $0x8] sm:$0xff]
        %v1897 = vld [vmem:[%s1894 + $0x10] sm:$0xff]
        %v1898 = vld [vmem:[%s1894 + $0x18] sm:$0xff]
        %v1899 = vld [vmem:[%s1894 + $0x20] sm:$0xff]
        %v1900 = vld [vmem:[%s1894 + $0x28] sm:$0xff]
        %v1901 = vld [vmem:[%s1894 + $0x30] sm:$0xff]
        %v1902 = vld [vmem:[%s1894 + $0x38] sm:$0xff]
        %v1904 = vsel %vm1746, %v1893, 0
        %1906 = vmatprep.subr.mxu0 0.0
        %1907 = vmatpush1.msra.mxu0 %v1895
        %1908 = vmatprep.subr.mxu0 0.0
        %1909 = vmatpush1.msra.mxu0 %v1896
        %1910 = vmatprep.subr.mxu0 0.0
        %1911 = vmatpush1.msra.mxu0 %v1897
        %1912 = vmatprep.subr.mxu0 0.0
        %1913 = vmatpush1.msra.mxu0 %v1898
        %1914 = vmatprep.subr.mxu0 0.0
        %1915 = vmatpush1.msra.mxu0 %v1899
        %1916 = vmatprep.subr.mxu0 0.0
        %1917 = vmatpush1.msra.mxu0 %v1900
        %1918 = vmatprep.subr.mxu0 0.0
        %1919 = vmatpush1.msra.mxu0 %v1901
        %1920 = vmatprep.subr.mxu0 0.0
        %1921 = vmatpush1.msra.mxu0 %v1902
        %1922 = vmatprep.subr.mxu0 0.0
        %1923 = vmatpush1.msra.mxu0 0.0
        %1924 = vmatprep.subr.mxu0 0.0
        %1925 = vmatpush1.msra.mxu0 0.0
        %1926 = vmatprep.subr.mxu0 0.0
        %1927 = vmatpush1.msra.mxu0 0.0
        %1928 = vmatprep.subr.mxu0 0.0
        %1929 = vmatpush1.msra.mxu0 0.0
        %1930 = vmatprep.subr.mxu0 0.0
        %1931 = vmatpush1.msra.mxu0 0.0
        %1932 = vmatprep.subr.mxu0 0.0
        %1933 = vmatpush1.msra.mxu0 0.0
        %1934 = vmatprep.subr.mxu0 0.0
        %1935 = vmatpush1.msra.mxu0 0.0
        %1936 = vmatprep.subr.mxu0 0.0
        %1937 = vmatpush1.msra.mxu0 0.0
        %1938 = vmatprep.subr.mxu0 0.0
        %1939 = vmatpush1.msra.mxu0 0.0
        %1940 = vmatprep.subr.mxu0 0.0
        %1941 = vmatpush1.msra.mxu0 0.0
        %1942 = vmatprep.subr.mxu0 0.0
        %1943 = vmatpush1.msra.mxu0 0.0
        %1944 = vmatprep.subr.mxu0 0.0
        %1945 = vmatpush1.msra.mxu0 0.0
        %1946 = vmatprep.subr.mxu0 0.0
        %1947 = vmatpush1.msra.mxu0 0.0
        %1948 = vmatprep.subr.mxu0 0.0
        %1949 = vmatpush1.msra.mxu0 0.0
        %1950 = vmatprep.subr.mxu0 0.0
        %1951 = vmatpush1.msra.mxu0 0.0
        %1952 = vmatprep.subr.mxu0 0.0
        %1953 = vmatpush1.msra.mxu0 0.0
        %1954 = vmatprep.subr.mxu0 0.0
        %1955 = vmatpush1.msra.mxu0 0.0
        %1956 = vmatprep.subr.mxu0 0.0
        %1957 = vmatpush1.msra.mxu0 0.0
        %1958 = vmatprep.subr.mxu0 0.0
        %1959 = vmatpush1.msra.mxu0 0.0
        %1960 = vmatprep.subr.mxu0 0.0
        %1961 = vmatpush1.msra.mxu0 0.0
        %1962 = vmatprep.subr.mxu0 0.0
        %1963 = vmatpush1.msra.mxu0 0.0
        %1964 = vmatprep.subr.mxu0 0.0
        %1965 = vmatpush1.msra.mxu0 0.0
        %1966 = vmatprep.subr.mxu0 0.0
        %1967 = vmatpush1.msra.mxu0 0.0
        %1968 = vmatprep.subr.mxu0 0.0
        %1969 = vmatpush1.msra.mxu0 0.0
        %1970 = vmatprep.mubr.f32.mxu0 0.0
        %1971 = vmatmul.mubr.f32.gmra.mrb[0].mxu0 %v1904
        %v1972 = vpop.f32.mrb[0].mxu0
        %v1973 = vadd.f32 0.0, %v1972
        %v1974 = vpop.f32.mrb[0].mxu0
        %1975 = vdwg.mxu0
        %v1976 = vadd.f32 %v1890, %v1973
        %v1977 = vld [vmem:[%s8] sm:$0x1]
        %v1979 = vlaneseq
        %v1980 = vshrl.u32 %v1979, 7
        %v1981 = vsub.s32 0, %v1980
        %v1982 = vrot.slane %v1977, %v1981
        %v1984 = vadd.f32 %v1976, %v1982
        %v1985 = vmax.f32 %v1984, 0.0
        %vm1986 = vcmask 254976
        %1987 = vst.msk [vmem:[%s551] sm:$0x3] %vm1986, %v1985
        %p1988 = scmp.lt.s32.totalorder %s29, 1
        %s1989 = scalar_select %p1988, %s29, 1
        %s1990 = smul.addr %s1989, 2
        %s1991 = smul.addr %s1990, 8
        %s1992 = scalar_lea.vmem %s13, %s1991
        %p1993 = scmp.lt.s32.totalorder %s29, 1
        %s1994 = scalar_select %p1993, %s29, 1
        %s1995 = smul.addr %s1994, 2
        %s1996 = scalar_lea.vmem %s14, %s1995
        // Predicated region
        $region93: #{forward.1} parent=71 // pred_check
          %p1997 = pneg %p325
        $region94: #{forward.1} parent=71 // pred_check_branch
          %1999 = sbr.rel (%p1997) target = $region96
        $region95: #{forward.1} parent=71 // pred_region
          _
        $region96: #{forward.1} parent=71 // pred_fallthru
          _
        // Predicated region
        $region97: #{forward.1} parent=71 // pred_check
          %p2000 = pneg %p351
        $region98: #{forward.1} parent=71 // pred_check_branch
          %2002 = sbr.rel (%p2000) target = $region100
        $region99: #{forward.1} parent=71 // pred_region
          _
        $region100: #{forward.1} parent=71 // pred_fallthru
          _
      $region72: #{forward.1} parent=5 // pred_fallthru
        _
      %p2003 = scmp.le.s32.totalorder 2, %s24
      // Predicated region
      $region101: #{forward.1} parent=5 // pred_check
        %p2004 = pneg %p2003
      $region102: #{forward.1} parent=5 // pred_check_branch
        %2006 = sbr.rel (%p2004) target = $region104
      $region103: #{forward.1} parent=5 // pred_region
        %s2007 = ssub.s32 %s24, 2
        // Predicated region
        $region105: #{forward.1} parent=103 // pred_check
          %p2008 = pneg %p331
        $region106: #{forward.1} parent=103 // pred_check_branch
          %2010 = sbr.rel (%p2008) target = $region108
        $region107: #{forward.1} parent=103 // pred_region
          %p2011 = scmp.lt.s32.totalorder %s30, 1
          %s2012 = scalar_select %p2011, %s30, 1
          %s2013 = smul.addr %s2012, 2
          %s2014 = smul.addr %s2013, 8
          %s2015 = scalar_lea.vmem %s13, %s2014
        $region108: #{forward.1} parent=103 // pred_fallthru
          _
        // Predicated region
        $region109: #{forward.1} parent=103 // pred_check
          %p2016 = pneg %p357
        $region110: #{forward.1} parent=103 // pred_check_branch
          %2018 = sbr.rel (%p2016) target = $region112
        $region111: #{forward.1} parent=103 // pred_region
          %p2019 = scmp.lt.s32.totalorder %s30, 1
          %s2020 = scalar_select %p2019, %s30, 1
          %s2021 = smul.addr %s2020, 2
          %s2022 = scalar_lea.vmem %s14, %s2021
        $region112: #{forward.1} parent=103 // pred_fallthru
          _
      $region104: #{forward.1} parent=5 // pred_fallthru
        _
    $region6: #{forward.1} parent=1 // loop_footer
      %s28 = sadd.s32 1, %s24
    $region7: #{forward.1} parent=1 // loop_footer_branch
      %23 = sbr.rel target = $region3
    $region8: #{forward.1} parent=1 // loop_exit
      _
    %2023 = vsyncpa [#allocation6], 1
    %s2024 = scalar_lea.sflag [#allocation6], 1
    %2025 = vsyncpa %s2024, 1
    %2026 = vsyncpa [#allocation8], 1
    %2027 = vsyncpa [#allocation11], 1

</llo_original>
